<compile_context>
chip_gen: v6e
topology: v6e:2x2x1
jax: 0.10.0
libtpu: 0.0.40
codegen_flags: <defaults>
</compile_context>

<pallas_src>
import math

import jax
import jax.numpy as jnp
from jax.experimental import pallas as pl
from jax.experimental.pallas import tpu as pltpu

D_MODEL = 32
NUM_HEADS = 4
D_HEAD = D_MODEL // NUM_HEADS


def _make_mha_kernel(nb, S, D, H, dh):
    """Kernel processing `nb` batch elements (nb*S rows) per grid step."""

    def kernel(x_ref, wqkv_ref, bqkv_ref, wo_ref, bo_ref, o_ref):
        # ---- fused QKV projection: one (nb*S, 3D) x (3D, 3D) MXU matmul ----
        x_bf = x_ref[...].astype(jnp.bfloat16)
        w_bf = wqkv_ref[...].astype(jnp.bfloat16)
        qkv = jnp.dot(x_bf, w_bf, preferred_element_type=jnp.float32) + bqkv_ref[...]
        # qkv: (nb*S, 3D) f32; cols [0,D)=Q*scale, [D,2D)=K, [2D,3D)=V, head-grouped.

        out_acc = jnp.zeros((nb * S, D), jnp.float32)

        # ---- per-head attention, batched over the nb batch elements ----
        for h in range(H):
            qc = slice(h * dh, (h + 1) * dh)
            kc = slice(D + h * dh, D + (h + 1) * dh)
            vc = slice(2 * D + h * dh, 2 * D + (h + 1) * dh)
            # Sublane-aligned leading-dim split: (nb*S, dh) -> (nb, S, dh).
            qh = qkv[:, qc].reshape(nb, S, dh).astype(jnp.bfloat16)
            kh = qkv[:, kc].reshape(nb, S, dh).astype(jnp.bfloat16)
            vh = qkv[:, vc].reshape(nb, S, dh).astype(jnp.bfloat16)

            # Batched NT matmul: contracts last dims, no materialized transpose.
            s = jnp.einsum("bqd,bkd->bqk", qh, kh,
                           preferred_element_type=jnp.float32)      # (nb, S, S)

            # Max-stabilized softmax in f32 (VPU/EUP); mask=None path.
            m = jnp.max(s, axis=-1, keepdims=True)
            e = jnp.exp(s - m)
            denom = jnp.sum(e, axis=-1, keepdims=True)
            attn = e * pl.reciprocal(denom, approx=True)
            # TODO(synk): attention dropout is identity in eval mode (p unused).

            ctx = jnp.einsum("bqk,bkd->bqd", attn.astype(jnp.bfloat16), vh,
                             preferred_element_type=jnp.float32)    # (nb, S, dh)

            # Per-head slice of the output projection: accumulate directly,
            # no (nb*S, D) context scratch / masked lane-slice stores.
            wo_h = wo_ref[qc, :].astype(jnp.bfloat16)                # (dh, D)
            out_acc = out_acc + jnp.dot(
                ctx.reshape(nb * S, dh).astype(jnp.bfloat16), wo_h,
                preferred_element_type=jnp.float32)

        o_ref[...] = (out_acc + bo_ref[...]).astype(o_ref.dtype)

    return kernel


def multi_head_attention(q, k, v, params, *, batch_block=None):
    B, S, D = q.shape
    assert D == D_MODEL
    H, dh = NUM_HEADS, D_HEAD

    nb = B if batch_block is None else batch_block   # batch elems per grid step
    assert B % nb == 0
    grid = (B // nb,)

    # Fuse the three projections: x = [q|k|v] flattened to (B*S, 3D),
    # block-diagonal (3D, 3D) weight (softmax scale folded into the Q block),
    # concatenated (1, 3D) bias.
    scale = 1.0 / math.sqrt(dh)
    x = jnp.concatenate([q, k, v], axis=-1).reshape(B * S, 3 * D)
    Z = jnp.zeros((D, D), dtype=params["wq"].dtype)
    w_qkv = jnp.block([[params["wq"] * scale, Z, Z],
                       [Z, params["wk"], Z],
                       [Z, Z, params["wv"]]])
    b_qkv = jnp.concatenate(
        [params["bq"] * scale, params["bk"], params["bv"]], axis=-1)

    kernel = _make_mha_kernel(nb, S, D, H, dh)

    out2d = pl.pallas_call(
        kernel,
        out_shape=jax.ShapeDtypeStruct((B * S, D), q.dtype),
        grid_spec=pltpu.PrefetchScalarGridSpec(
            num_scalar_prefetch=0,
            grid=grid,
            in_specs=[
                pl.BlockSpec((nb * S, 3 * D), lambda i: (i, 0)),   # fused inputs
                pl.BlockSpec((3 * D, 3 * D), lambda i: (0, 0)),    # fused QKV weight
                pl.BlockSpec((1, 3 * D), lambda i: (0, 0)),        # fused QKV bias
                pl.BlockSpec((D, D), lambda i: (0, 0)),            # out-proj weight
                pl.BlockSpec((1, D), lambda i: (0, 0)),            # out-proj bias
            ],
            out_specs=pl.BlockSpec((nb * S, D), lambda i: (i, 0)),
        ),
        compiler_params=pltpu.CompilerParams(dimension_semantics=("parallel",)),
    )(x, w_qkv, b_qkv, params["wo"], params["bo"])

    return out2d.reshape(B, S, D)


def mha_reference(q, k, v, params):
    """Pure-JAX f32 reference with identical semantics (eval mode, no mask)."""
    B, S, D = q.shape
    H, dh = NUM_HEADS, D_HEAD

    def proj(x, w, b):
        return x @ w + b

    Q = proj(q, params["wq"], params["bq"]).reshape(B, S, H, dh).transpose(0, 2, 1, 3)
    K = proj(k, params["wk"], params["bk"]).reshape(B, S, H, dh).transpose(0, 2, 1, 3)
    V = proj(v, params["wv"], params["bv"]).reshape(B, S, H, dh).transpose(0, 2, 1, 3)
    scores = jnp.einsum("bhsd,bhtd->bhst", Q, K) / math.sqrt(dh)
    attn = jax.nn.softmax(scores, axis=-1)
    ctx = jnp.einsum("bhst,bhtd->bhsd", attn, V).transpose(0, 2, 1, 3).reshape(B, S, D)
    return ctx @ params["wo"] + params["bo"]


if __name__ == "__main__":
    B, S, D = 2, 8, D_MODEL

    key = jax.random.PRNGKey(0)
    keys = jax.random.split(key, 12)

    def w_init(kk):
        return (0.02 * jax.random.normal(kk, (D, D))).astype(jnp.float32)

    def b_init(kk):
        return (0.01 * jax.random.normal(kk, (1, D))).astype(jnp.float32)

    params = {
        "wq": w_init(keys[0]), "bq": b_init(keys[1]),
        "wk": w_init(keys[2]), "bk": b_init(keys[3]),
        "wv": w_init(keys[4]), "bv": b_init(keys[5]),
        "wo": w_init(keys[6]), "bo": b_init(keys[7]),
    }

    q = jax.random.normal(keys[8], (B, S, D), dtype=jnp.float32)
    k = jax.random.normal(keys[9], (B, S, D), dtype=jnp.float32)
    v = jax.random.normal(keys[10], (B, S, D), dtype=jnp.float32)

    out = multi_head_attention(q, k, v, params)
    out = jax.block_until_ready(out)

    ref = mha_reference(q, k, v, params)
    assert out.shape == (B, S, D)
    # Tolerance loosened because MXU operands are cast to bfloat16 in-kernel.
    assert jnp.allclose(out, ref, atol=1e-2, rtol=1e-2), "mismatch vs reference"

    print("KERNEL_OK")
</pallas_src>

<mosaic_0001>
module attributes {stable_mosaic.version = 11 : i64} {
  func.func @kernel(%arg0: i32, %arg1: memref<16x96xf32, #tpu.memory_space<vmem>>, %arg2: memref<96x96xf32, #tpu.memory_space<vmem>>, %arg3: memref<1x96xf32, #tpu.memory_space<vmem>>, %arg4: memref<32x32xf32, #tpu.memory_space<vmem>>, %arg5: memref<1x32xf32, #tpu.memory_space<vmem>>, %arg6: memref<16x32xf32, #tpu.memory_space<vmem>>) attributes {dimension_semantics = [#tpu.dimension_semantics<parallel>], iteration_bounds = array<i64: 1>, scalar_prefetch = 0 : i64, scratch_operands = 0 : i64, tpu.core_type = #tpu.core_type<tc>, window_params = [{transform_indices = @transform_0, window_bounds = array<i64: 16, 96>}, {pipeline_mode = #tpu.pipeline_mode<synchronous>, transform_indices = @transform_1, window_bounds = array<i64: 96, 96>}, {pipeline_mode = #tpu.pipeline_mode<synchronous>, transform_indices = @transform_2, window_bounds = array<i64: 1, 96>}, {pipeline_mode = #tpu.pipeline_mode<synchronous>, transform_indices = @transform_3, window_bounds = array<i64: 32, 32>}, {pipeline_mode = #tpu.pipeline_mode<synchronous>, transform_indices = @transform_4, window_bounds = array<i64: 1, 32>}, {transform_indices = @transform_5, window_bounds = array<i64: 16, 32>}]} {
    %c0 = arith.constant 0 : index
    %c0_0 = arith.constant 0 : index
    %0 = vector.load %arg1[%c0, %c0_0] : memref<16x96xf32, #tpu.memory_space<vmem>>, vector<16x96xf32>
    %1 = arith.truncf %0 : vector<16x96xf32> to vector<16x96xbf16>
    %c0_1 = arith.constant 0 : index
    %c0_2 = arith.constant 0 : index
    %2 = vector.load %arg2[%c0_1, %c0_2] : memref<96x96xf32, #tpu.memory_space<vmem>>, vector<96x96xf32>
    %3 = arith.truncf %2 : vector<96x96xf32> to vector<96x96xbf16>
    %cst = arith.constant dense<0.000000e+00> : vector<16x96xf32>
    %4 = tpu.matmul %1, %3, %cst {dimension_numbers = #tpu.dot_dimension_numbers<[1], [0], [0], [1], [0, 0, 1, 1], [], []>} : vector<16x96xbf16>, vector<96x96xbf16>, vector<16x96xf32> -> vector<16x96xf32>
    %c0_3 = arith.constant 0 : index
    %c0_4 = arith.constant 0 : index
    %5 = vector.load %arg3[%c0_3, %c0_4] : memref<1x96xf32, #tpu.memory_space<vmem>>, vector<1x96xf32>
    %6 = vector.broadcast %5 : vector<1x96xf32> to vector<16x96xf32>
    %7 = arith.addf %4, %6 : vector<16x96xf32>
    %cst_5 = arith.constant 0.000000e+00 : f32
    %8 = vector.broadcast %cst_5 : f32 to vector<16x32xf32>
    %9 = vector.extract_strided_slice %7 {offsets = [0, 0], sizes = [16, 8], strides = [1, 1]} : vector<16x96xf32> to vector<16x8xf32>
    %10 = vector.shape_cast %9 : vector<16x8xf32> to vector<2x8x8xf32>
    %11 = arith.truncf %10 : vector<2x8x8xf32> to vector<2x8x8xbf16>
    %12 = vector.extract_strided_slice %7 {offsets = [0, 32], sizes = [16, 8], strides = [1, 1]} : vector<16x96xf32> to vector<16x8xf32>
    %13 = vector.shape_cast %12 : vector<16x8xf32> to vector<2x8x8xf32>
    %14 = arith.truncf %13 : vector<2x8x8xf32> to vector<2x8x8xbf16>
    %15 = vector.extract_strided_slice %7 {offsets = [0, 64], sizes = [16, 8], strides = [1, 1]} : vector<16x96xf32> to vector<16x8xf32>
    %16 = vector.shape_cast %15 : vector<16x8xf32> to vector<2x8x8xf32>
    %17 = arith.truncf %16 : vector<2x8x8xf32> to vector<2x8x8xbf16>
    "tpu.trace_start"() <{level = 10 : i32, message = "bqd,bkd->bqk"}> : () -> ()
    %cst_6 = arith.constant dense<0.000000e+00> : vector<2x8x8xf32>
    %18 = tpu.matmul %11, %14, %cst_6 {dimension_numbers = #tpu.dot_dimension_numbers<[2], [2], [1], [1], [0, 0, 0, 1, 1, 1], [0], [0]>} : vector<2x8x8xbf16>, vector<2x8x8xbf16>, vector<2x8x8xf32> -> vector<2x8x8xf32>
    "tpu.trace_stop"() : () -> ()
    %cst_7 = arith.constant dense<0xFF800000> : vector<2x8xf32>
    %19 = vector.multi_reduction <maximumf>, %18, %cst_7 [2] : vector<2x8x8xf32> to vector<2x8xf32>
    %20 = vector.shape_cast %19 : vector<2x8xf32> to vector<2x8x1xf32>
    %21 = vector.broadcast %20 : vector<2x8x1xf32> to vector<2x8x8xf32>
    %22 = arith.subf %18, %21 : vector<2x8x8xf32>
    %23 = math.exp %22 : vector<2x8x8xf32>
    %cst_8 = arith.constant dense<0.000000e+00> : vector<2x8xf32>
    %24 = vector.multi_reduction <add>, %23, %cst_8 [2] : vector<2x8x8xf32> to vector<2x8xf32>
    %25 = vector.shape_cast %24 : vector<2x8xf32> to vector<2x8x1xf32>
    %26 = tpu.reciprocal %25 {approx = true} : vector<2x8x1xf32> -> vector<2x8x1xf32>
    %27 = vector.broadcast %26 : vector<2x8x1xf32> to vector<2x8x8xf32>
    %28 = arith.mulf %23, %27 : vector<2x8x8xf32>
    %29 = arith.truncf %28 : vector<2x8x8xf32> to vector<2x8x8xbf16>
    "tpu.trace_start"() <{level = 10 : i32, message = "bqk,bkd->bqd"}> : () -> ()
    %cst_9 = arith.constant dense<0.000000e+00> : vector<2x8x8xf32>
    %30 = tpu.matmul %29, %17, %cst_9 {dimension_numbers = #tpu.dot_dimension_numbers<[2], [1], [1], [2], [0, 0, 0, 1, 1, 2], [0], [0]>} : vector<2x8x8xbf16>, vector<2x8x8xbf16>, vector<2x8x8xf32> -> vector<2x8x8xf32>
    "tpu.trace_stop"() : () -> ()
    %c0_10 = arith.constant 0 : index
    %c0_11 = arith.constant 0 : index
    %31 = vector.load %arg4[%c0_10, %c0_11] : memref<32x32xf32, #tpu.memory_space<vmem>>, vector<8x32xf32>
    %32 = arith.truncf %31 : vector<8x32xf32> to vector<8x32xbf16>
    %33 = vector.shape_cast %30 : vector<2x8x8xf32> to vector<16x8xf32>
    %34 = arith.truncf %33 : vector<16x8xf32> to vector<16x8xbf16>
    %cst_12 = arith.constant dense<0.000000e+00> : vector<16x32xf32>
    %35 = tpu.matmul %34, %32, %cst_12 {dimension_numbers = #tpu.dot_dimension_numbers<[1], [0], [0], [1], [0, 0, 1, 1], [], []>} : vector<16x8xbf16>, vector<8x32xbf16>, vector<16x32xf32> -> vector<16x32xf32>
    %36 = arith.addf %8, %35 : vector<16x32xf32>
    %37 = vector.extract_strided_slice %7 {offsets = [0, 8], sizes = [16, 8], strides = [1, 1]} : vector<16x96xf32> to vector<16x8xf32>
    %38 = vector.shape_cast %37 : vector<16x8xf32> to vector<2x8x8xf32>
    %39 = arith.truncf %38 : vector<2x8x8xf32> to vector<2x8x8xbf16>
    %40 = vector.extract_strided_slice %7 {offsets = [0, 40], sizes = [16, 8], strides = [1, 1]} : vector<16x96xf32> to vector<16x8xf32>
    %41 = vector.shape_cast %40 : vector<16x8xf32> to vector<2x8x8xf32>
    %42 = arith.truncf %41 : vector<2x8x8xf32> to vector<2x8x8xbf16>
    %43 = vector.extract_strided_slice %7 {offsets = [0, 72], sizes = [16, 8], strides = [1, 1]} : vector<16x96xf32> to vector<16x8xf32>
    %44 = vector.shape_cast %43 : vector<16x8xf32> to vector<2x8x8xf32>
    %45 = arith.truncf %44 : vector<2x8x8xf32> to vector<2x8x8xbf16>
    "tpu.trace_start"() <{level = 10 : i32, message = "bqd,bkd->bqk"}> : () -> ()
    %cst_13 = arith.constant dense<0.000000e+00> : vector<2x8x8xf32>
    %46 = tpu.matmul %39, %42, %cst_13 {dimension_numbers = #tpu.dot_dimension_numbers<[2], [2], [1], [1], [0, 0, 0, 1, 1, 1], [0], [0]>} : vector<2x8x8xbf16>, vector<2x8x8xbf16>, vector<2x8x8xf32> -> vector<2x8x8xf32>
    "tpu.trace_stop"() : () -> ()
    %cst_14 = arith.constant dense<0xFF800000> : vector<2x8xf32>
    %47 = vector.multi_reduction <maximumf>, %46, %cst_14 [2] : vector<2x8x8xf32> to vector<2x8xf32>
    %48 = vector.shape_cast %47 : vector<2x8xf32> to vector<2x8x1xf32>
    %49 = vector.broadcast %48 : vector<2x8x1xf32> to vector<2x8x8xf32>
    %50 = arith.subf %46, %49 : vector<2x8x8xf32>
    %51 = math.exp %50 : vector<2x8x8xf32>
    %cst_15 = arith.constant dense<0.000000e+00> : vector<2x8xf32>
    %52 = vector.multi_reduction <add>, %51, %cst_15 [2] : vector<2x8x8xf32> to vector<2x8xf32>
    %53 = vector.shape_cast %52 : vector<2x8xf32> to vector<2x8x1xf32>
    %54 = tpu.reciprocal %53 {approx = true} : vector<2x8x1xf32> -> vector<2x8x1xf32>
    %55 = vector.broadcast %54 : vector<2x8x1xf32> to vector<2x8x8xf32>
    %56 = arith.mulf %51, %55 : vector<2x8x8xf32>
    %57 = arith.truncf %56 : vector<2x8x8xf32> to vector<2x8x8xbf16>
    "tpu.trace_start"() <{level = 10 : i32, message = "bqk,bkd->bqd"}> : () -> ()
    %cst_16 = arith.constant dense<0.000000e+00> : vector<2x8x8xf32>
    %58 = tpu.matmul %57, %45, %cst_16 {dimension_numbers = #tpu.dot_dimension_numbers<[2], [1], [1], [2], [0, 0, 0, 1, 1, 2], [0], [0]>} : vector<2x8x8xbf16>, vector<2x8x8xbf16>, vector<2x8x8xf32> -> vector<2x8x8xf32>
    "tpu.trace_stop"() : () -> ()
    %c8 = arith.constant 8 : index
    %c0_17 = arith.constant 0 : index
    %59 = vector.load %arg4[%c8, %c0_17] : memref<32x32xf32, #tpu.memory_space<vmem>>, vector<8x32xf32>
    %60 = arith.truncf %59 : vector<8x32xf32> to vector<8x32xbf16>
    %61 = vector.shape_cast %58 : vector<2x8x8xf32> to vector<16x8xf32>
    %62 = arith.truncf %61 : vector<16x8xf32> to vector<16x8xbf16>
    %cst_18 = arith.constant dense<0.000000e+00> : vector<16x32xf32>
    %63 = tpu.matmul %62, %60, %cst_18 {dimension_numbers = #tpu.dot_dimension_numbers<[1], [0], [0], [1], [0, 0, 1, 1], [], []>} : vector<16x8xbf16>, vector<8x32xbf16>, vector<16x32xf32> -> vector<16x32xf32>
    %64 = arith.addf %36, %63 : vector<16x32xf32>
    %65 = vector.extract_strided_slice %7 {offsets = [0, 16], sizes = [16, 8], strides = [1, 1]} : vector<16x96xf32> to vector<16x8xf32>
    %66 = vector.shape_cast %65 : vector<16x8xf32> to vector<2x8x8xf32>
    %67 = arith.truncf %66 : vector<2x8x8xf32> to vector<2x8x8xbf16>
    %68 = vector.extract_strided_slice %7 {offsets = [0, 48], sizes = [16, 8], strides = [1, 1]} : vector<16x96xf32> to vector<16x8xf32>
    %69 = vector.shape_cast %68 : vector<16x8xf32> to vector<2x8x8xf32>
    %70 = arith.truncf %69 : vector<2x8x8xf32> to vector<2x8x8xbf16>
    %71 = vector.extract_strided_slice %7 {offsets = [0, 80], sizes = [16, 8], strides = [1, 1]} : vector<16x96xf32> to vector<16x8xf32>
    %72 = vector.shape_cast %71 : vector<16x8xf32> to vector<2x8x8xf32>
    %73 = arith.truncf %72 : vector<2x8x8xf32> to vector<2x8x8xbf16>
    "tpu.trace_start"() <{level = 10 : i32, message = "bqd,bkd->bqk"}> : () -> ()
    %cst_19 = arith.constant dense<0.000000e+00> : vector<2x8x8xf32>
    %74 = tpu.matmul %67, %70, %cst_19 {dimension_numbers = #tpu.dot_dimension_numbers<[2], [2], [1], [1], [0, 0, 0, 1, 1, 1], [0], [0]>} : vector<2x8x8xbf16>, vector<2x8x8xbf16>, vector<2x8x8xf32> -> vector<2x8x8xf32>
    "tpu.trace_stop"() : () -> ()
    %cst_20 = arith.constant dense<0xFF800000> : vector<2x8xf32>
    %75 = vector.multi_reduction <maximumf>, %74, %cst_20 [2] : vector<2x8x8xf32> to vector<2x8xf32>
    %76 = vector.shape_cast %75 : vector<2x8xf32> to vector<2x8x1xf32>
    %77 = vector.broadcast %76 : vector<2x8x1xf32> to vector<2x8x8xf32>
    %78 = arith.subf %74, %77 : vector<2x8x8xf32>
    %79 = math.exp %78 : vector<2x8x8xf32>
    %cst_21 = arith.constant dense<0.000000e+00> : vector<2x8xf32>
    %80 = vector.multi_reduction <add>, %79, %cst_21 [2] : vector<2x8x8xf32> to vector<2x8xf32>
    %81 = vector.shape_cast %80 : vector<2x8xf32> to vector<2x8x1xf32>
    %82 = tpu.reciprocal %81 {approx = true} : vector<2x8x1xf32> -> vector<2x8x1xf32>
    %83 = vector.broadcast %82 : vector<2x8x1xf32> to vector<2x8x8xf32>
    %84 = arith.mulf %79, %83 : vector<2x8x8xf32>
    %85 = arith.truncf %84 : vector<2x8x8xf32> to vector<2x8x8xbf16>
    "tpu.trace_start"() <{level = 10 : i32, message = "bqk,bkd->bqd"}> : () -> ()
    %cst_22 = arith.constant dense<0.000000e+00> : vector<2x8x8xf32>
    %86 = tpu.matmul %85, %73, %cst_22 {dimension_numbers = #tpu.dot_dimension_numbers<[2], [1], [1], [2], [0, 0, 0, 1, 1, 2], [0], [0]>} : vector<2x8x8xbf16>, vector<2x8x8xbf16>, vector<2x8x8xf32> -> vector<2x8x8xf32>
    "tpu.trace_stop"() : () -> ()
    %c16 = arith.constant 16 : index
    %c0_23 = arith.constant 0 : index
    %87 = vector.load %arg4[%c16, %c0_23] : memref<32x32xf32, #tpu.memory_space<vmem>>, vector<8x32xf32>
    %88 = arith.truncf %87 : vector<8x32xf32> to vector<8x32xbf16>
    %89 = vector.shape_cast %86 : vector<2x8x8xf32> to vector<16x8xf32>
    %90 = arith.truncf %89 : vector<16x8xf32> to vector<16x8xbf16>
    %cst_24 = arith.constant dense<0.000000e+00> : vector<16x32xf32>
    %91 = tpu.matmul %90, %88, %cst_24 {dimension_numbers = #tpu.dot_dimension_numbers<[1], [0], [0], [1], [0, 0, 1, 1], [], []>} : vector<16x8xbf16>, vector<8x32xbf16>, vector<16x32xf32> -> vector<16x32xf32>
    %92 = arith.addf %64, %91 : vector<16x32xf32>
    %93 = vector.extract_strided_slice %7 {offsets = [0, 24], sizes = [16, 8], strides = [1, 1]} : vector<16x96xf32> to vector<16x8xf32>
    %94 = vector.shape_cast %93 : vector<16x8xf32> to vector<2x8x8xf32>
    %95 = arith.truncf %94 : vector<2x8x8xf32> to vector<2x8x8xbf16>
    %96 = vector.extract_strided_slice %7 {offsets = [0, 56], sizes = [16, 8], strides = [1, 1]} : vector<16x96xf32> to vector<16x8xf32>
    %97 = vector.shape_cast %96 : vector<16x8xf32> to vector<2x8x8xf32>
    %98 = arith.truncf %97 : vector<2x8x8xf32> to vector<2x8x8xbf16>
    %99 = vector.extract_strided_slice %7 {offsets = [0, 88], sizes = [16, 8], strides = [1, 1]} : vector<16x96xf32> to vector<16x8xf32>
    %100 = vector.shape_cast %99 : vector<16x8xf32> to vector<2x8x8xf32>
    %101 = arith.truncf %100 : vector<2x8x8xf32> to vector<2x8x8xbf16>
    "tpu.trace_start"() <{level = 10 : i32, message = "bqd,bkd->bqk"}> : () -> ()
    %cst_25 = arith.constant dense<0.000000e+00> : vector<2x8x8xf32>
    %102 = tpu.matmul %95, %98, %cst_25 {dimension_numbers = #tpu.dot_dimension_numbers<[2], [2], [1], [1], [0, 0, 0, 1, 1, 1], [0], [0]>} : vector<2x8x8xbf16>, vector<2x8x8xbf16>, vector<2x8x8xf32> -> vector<2x8x8xf32>
    "tpu.trace_stop"() : () -> ()
    %cst_26 = arith.constant dense<0xFF800000> : vector<2x8xf32>
    %103 = vector.multi_reduction <maximumf>, %102, %cst_26 [2] : vector<2x8x8xf32> to vector<2x8xf32>
    %104 = vector.shape_cast %103 : vector<2x8xf32> to vector<2x8x1xf32>
    %105 = vector.broadcast %104 : vector<2x8x1xf32> to vector<2x8x8xf32>
    %106 = arith.subf %102, %105 : vector<2x8x8xf32>
    %107 = math.exp %106 : vector<2x8x8xf32>
    %cst_27 = arith.constant dense<0.000000e+00> : vector<2x8xf32>
    %108 = vector.multi_reduction <add>, %107, %cst_27 [2] : vector<2x8x8xf32> to vector<2x8xf32>
    %109 = vector.shape_cast %108 : vector<2x8xf32> to vector<2x8x1xf32>
    %110 = tpu.reciprocal %109 {approx = true} : vector<2x8x1xf32> -> vector<2x8x1xf32>
    %111 = vector.broadcast %110 : vector<2x8x1xf32> to vector<2x8x8xf32>
    %112 = arith.mulf %107, %111 : vector<2x8x8xf32>
    %113 = arith.truncf %112 : vector<2x8x8xf32> to vector<2x8x8xbf16>
    "tpu.trace_start"() <{level = 10 : i32, message = "bqk,bkd->bqd"}> : () -> ()
    %cst_28 = arith.constant dense<0.000000e+00> : vector<2x8x8xf32>
    %114 = tpu.matmul %113, %101, %cst_28 {dimension_numbers = #tpu.dot_dimension_numbers<[2], [1], [1], [2], [0, 0, 0, 1, 1, 2], [0], [0]>} : vector<2x8x8xbf16>, vector<2x8x8xbf16>, vector<2x8x8xf32> -> vector<2x8x8xf32>
    "tpu.trace_stop"() : () -> ()
    %c24 = arith.constant 24 : index
    %c0_29 = arith.constant 0 : index
    %115 = vector.load %arg4[%c24, %c0_29] : memref<32x32xf32, #tpu.memory_space<vmem>>, vector<8x32xf32>
    %116 = arith.truncf %115 : vector<8x32xf32> to vector<8x32xbf16>
    %117 = vector.shape_cast %114 : vector<2x8x8xf32> to vector<16x8xf32>
    %118 = arith.truncf %117 : vector<16x8xf32> to vector<16x8xbf16>
    %cst_30 = arith.constant dense<0.000000e+00> : vector<16x32xf32>
    %119 = tpu.matmul %118, %116, %cst_30 {dimension_numbers = #tpu.dot_dimension_numbers<[1], [0], [0], [1], [0, 0, 1, 1], [], []>} : vector<16x8xbf16>, vector<8x32xbf16>, vector<16x32xf32> -> vector<16x32xf32>
    %120 = arith.addf %92, %119 : vector<16x32xf32>
    %c0_31 = arith.constant 0 : index
    %c0_32 = arith.constant 0 : index
    %121 = vector.load %arg5[%c0_31, %c0_32] : memref<1x32xf32, #tpu.memory_space<vmem>>, vector<1x32xf32>
    %122 = vector.broadcast %121 : vector<1x32xf32> to vector<16x32xf32>
    %123 = arith.addf %120, %122 : vector<16x32xf32>
    %c0_33 = arith.constant 0 : index
    %c0_34 = arith.constant 0 : index
    %124 = vector.load %arg6[%c0_33, %c0_34] : memref<16x32xf32, #tpu.memory_space<vmem>>, vector<16x32xf32>
    tpu.vector_store %arg6[%c0_33, %c0_34], %123 {strides = array<i32>} : memref<16x32xf32, #tpu.memory_space<vmem>>, vector<16x32xf32>,
    return
  }
  func.func @transform_0(%arg0: i32) -> (i32, i32) {
    %c0_i32 = arith.constant 0 : i32
    %c0_i32_0 = arith.constant 0 : i32
    return %arg0, %c0_i32 : i32, i32
  }
  func.func @transform_1(%arg0: i32) -> (i32, i32) {
    %c0_i32 = arith.constant 0 : i32
    %c0_i32_0 = arith.constant 0 : i32
    %c0_i32_1 = arith.constant 0 : i32
    return %c0_i32, %c0_i32_0 : i32, i32
  }
  func.func @transform_2(%arg0: i32) -> (i32, i32) {
    %c0_i32 = arith.constant 0 : i32
    %c0_i32_0 = arith.constant 0 : i32
    %c0_i32_1 = arith.constant 0 : i32
    return %c0_i32, %c0_i32_0 : i32, i32
  }
  func.func @transform_3(%arg0: i32) -> (i32, i32) {
    %c0_i32 = arith.constant 0 : i32
    %c0_i32_0 = arith.constant 0 : i32
    %c0_i32_1 = arith.constant 0 : i32
    return %c0_i32, %c0_i32_0 : i32, i32
  }
  func.func @transform_4(%arg0: i32) -> (i32, i32) {
    %c0_i32 = arith.constant 0 : i32
    %c0_i32_0 = arith.constant 0 : i32
    %c0_i32_1 = arith.constant 0 : i32
    return %c0_i32, %c0_i32_0 : i32, i32
  }
  func.func @transform_5(%arg0: i32) -> (i32, i32) {
    %c0_i32 = arith.constant 0 : i32
    %c0_i32_0 = arith.constant 0 : i32
    return %arg0, %c0_i32 : i32, i32
  }
}

</mosaic_0001>

<llo_original>
// kernel: tpu_custom_call.1
$region0: #{tpu_custom_call.1}
  #allocation0 [shape = 'u32[]', space=smem, size = 0x4, offset = 0x4, fixed_abs, tag = 'smem constant byte address 0x4 - core index']
  #allocation1 [shape = 'u32[144,128]{1,0:T(1,128)}', space=vmem, size = 0x12000, scoped, tag = 'internal scratch']
  %s0 = inlined_call_operand.hbm [shape: f32[16,96], index: 0, kind: input, shape index: {}]
  %s1 = inlined_call_operand.hbm [shape: f32[96,96], index: 1, kind: input, shape index: {}]
  %s2 = inlined_call_operand.vmem [shape: f32[1,96], index: 2, kind: input, shape index: {}]
  %s3 = inlined_call_operand.hbm [shape: f32[32,32], index: 3, kind: input, shape index: {}]
  %s4 = inlined_call_operand.vmem [shape: f32[1,32], index: 4, kind: input, shape index: {}]
  %s5 = inlined_call_operand.hbm [shape: f32[16,32], index: 5, kind: output, shape index: {}]
  %s6 = sld [smem:[#allocation0]]
  $region42: #{tpu_custom_call.1} parent=0
    _
  %s8 = ssub.s32 1, %s6
  %s9 = scalar_select 0, %s8, %s6
  $region1: #{tpu_custom_call.1} parent=0
    #allocation2 [shape = 'u8[8192]{0}', space=vmem, size = 0x2000, scoped, tag = 'input window, operand 0, single buffered']
    #allocation3 [shape = 's32[1]{0}', space=sflag, size = 0x4, scoped, tag = 'scoped memory for tpu_custom_call.1']
    #allocation4 [shape = 's32[1]{0}', space=sflag, size = 0x4, scoped, tag = 'scoped memory for tpu_custom_call.1']
    #allocation5 [shape = 'u8[49152]{0}', space=vmem, size = 0xc000, scoped, tag = 'input window, operand 1, single buffered']
    #allocation6 [shape = 's32[1]{0}', space=sflag, size = 0x4, scoped, tag = 'scoped memory for tpu_custom_call.1']
    #allocation7 [shape = 'u8[16384]{0}', space=vmem, size = 0x4000, scoped, tag = 'input window, operand 3, single buffered']
    #allocation8 [shape = 'u8[8192]{0}', space=vmem, size = 0x2000, scoped, tag = 'output window, operand 0, single buffered']
    %10 = vsyncpa [#allocation3], 0
    %11 = vsyncpa [#allocation6], 0
    %12 = vsyncpa [#allocation4], 0
    // Predicated region
    $region2: #{tpu_custom_call.1} parent=1 // pred_check
      _
    $region3: #{tpu_custom_call.1} parent=1 // pred_check_branch
      %14 = sbr.rel (0) target = $region5
    $region4: #{tpu_custom_call.1} parent=1 // pred_region
      %s16 = ssub.s32 256, 256
      %17 = vsyncadd [#allocation3], %s16
      %s18 = sshll.u32 [#allocation2], 4
      %s19 = int_to_ptr.vmem [resolvable:$true] %s18
      %24 = dma.hbm_to_vmem [thread:$0]  %s0, 256, %s19, [#allocation3], 128, 128, 8
    $region5: #{tpu_custom_call.1} parent=1 // pred_fallthru
      _
    // Predicated region
    $region6: #{tpu_custom_call.1} parent=1 // pred_check
      _
    $region7: #{tpu_custom_call.1} parent=1 // pred_check_branch
      %26 = sbr.rel (0) target = $region9
    $region8: #{tpu_custom_call.1} parent=1 // pred_region
      %s28 = ssub.s32 1536, 1536
      %29 = vsyncadd [#allocation6], %s28
      %s30 = sshll.u32 [#allocation5], 4
      %s31 = int_to_ptr.vmem [resolvable:$true] %s30
      %36 = dma.hbm_to_vmem [thread:$0]  %s1, 1536, %s31, [#allocation6], 128, 128, 8
    $region9: #{tpu_custom_call.1} parent=1 // pred_fallthru
      _
    // Predicated region
    $region10: #{tpu_custom_call.1} parent=1 // pred_check
      _
    $region11: #{tpu_custom_call.1} parent=1 // pred_check_branch
      %38 = sbr.rel (0) target = $region13
    $region12: #{tpu_custom_call.1} parent=1 // pred_region
      _
    $region13: #{tpu_custom_call.1} parent=1 // pred_fallthru
      _
    // Predicated region
    $region14: #{tpu_custom_call.1} parent=1 // pred_check
      _
    $region15: #{tpu_custom_call.1} parent=1 // pred_check_branch
      %40 = sbr.rel (0) target = $region17
    $region16: #{tpu_custom_call.1} parent=1 // pred_region
      %s42 = ssub.s32 512, 512
      %43 = vsyncadd [#allocation6], %s42
      %s44 = sshll.u32 [#allocation7], 4
      %s45 = int_to_ptr.vmem [resolvable:$true] %s44
      %50 = dma.hbm_to_vmem [thread:$0]  %s3, 512, %s45, [#allocation6], 128, 128, 8
    $region17: #{tpu_custom_call.1} parent=1 // pred_fallthru
      _
    // Predicated region
    $region18: #{tpu_custom_call.1} parent=1 // pred_check
      _
    $region19: #{tpu_custom_call.1} parent=1 // pred_check_branch
      %52 = sbr.rel (0) target = $region21
    $region20: #{tpu_custom_call.1} parent=1 // pred_region
      _
    $region21: #{tpu_custom_call.1} parent=1 // pred_fallthru
      _
    // Predicated region
    $region22: #{tpu_custom_call.1} parent=1 // pred_check
      _
    $region23: #{tpu_custom_call.1} parent=1 // pred_check_branch
      %54 = sbr.rel (0) target = $region25
    $region24: #{tpu_custom_call.1} parent=1 // pred_region
      %55 = dma.done [#allocation3], 256
    $region25: #{tpu_custom_call.1} parent=1 // pred_fallthru
      _
    // Predicated region
    $region26: #{tpu_custom_call.1} parent=1 // pred_check
      _
    $region27: #{tpu_custom_call.1} parent=1 // pred_check_branch
      %57 = sbr.rel (0) target = $region29
    $region28: #{tpu_custom_call.1} parent=1 // pred_region
      %58 = dma.done [#allocation6], 1536
    $region29: #{tpu_custom_call.1} parent=1 // pred_fallthru
      _
    // Predicated region
    $region30: #{tpu_custom_call.1} parent=1 // pred_check
      _
    $region31: #{tpu_custom_call.1} parent=1 // pred_check_branch
      %60 = sbr.rel (0) target = $region33
    $region32: #{tpu_custom_call.1} parent=1 // pred_region
      %61 = dma.done [#allocation6], 512
    $region33: #{tpu_custom_call.1} parent=1 // pred_fallthru
      _
    %v63 = vld [vmem:[#allocation2] sm:$0xff]
    %v64 = vld [vmem:[#allocation2 + $0x8] sm:$0xff]
    %v65 = vpack.c.bf16 %v64, %v63
    %v66 = vld [vmem:[#allocation5] sm:$0xff]
    %v67 = vld [vmem:[#allocation5 + $0x8] sm:$0xff]
    %v68 = vld [vmem:[#allocation5 + $0x10] sm:$0xff]
    %v69 = vld [vmem:[#allocation5 + $0x18] sm:$0xff]
    %v70 = vld [vmem:[#allocation5 + $0x20] sm:$0xff]
    %v71 = vld [vmem:[#allocation5 + $0x28] sm:$0xff]
    %v72 = vld [vmem:[#allocation5 + $0x30] sm:$0xff]
    %v73 = vld [vmem:[#allocation5 + $0x38] sm:$0xff]
    %v74 = vld [vmem:[#allocation5 + $0x40] sm:$0xff]
    %v75 = vld [vmem:[#allocation5 + $0x48] sm:$0xff]
    %v76 = vld [vmem:[#allocation5 + $0x50] sm:$0xff]
    %v77 = vld [vmem:[#allocation5 + $0x58] sm:$0xff]
    %v78 = vpack.c.bf16 %v67, %v66
    %v79 = vpack.c.bf16 %v69, %v68
    %v80 = vpack.c.bf16 %v71, %v70
    %v81 = vpack.c.bf16 %v73, %v72
    %v82 = vpack.c.bf16 %v75, %v74
    %v83 = vpack.c.bf16 %v77, %v76
    %v84 = vld [vmem:[%s2] sm:$0x1]
    %v86 = vlaneseq
    %v87 = vshrl.u32 %v86, 7
    %v88 = vsub.s32 0, %v87
    %v89 = vrot.slane %v84, %v88
    %vm91 = vcmask 785408
    %v93 = vsel %vm91, %v65, 0
    %95 = vmatprep.subr.bf16.mxu0 0
    %96 = vmatpush1.bf16.msra.mxu0 0
    %97 = vmatprep.subr.bf16.mxu0 0
    %98 = vmatpush1.bf16.msra.mxu0 0
    %99 = vmatprep.subr.bf16.mxu0 0
    %100 = vmatpush1.bf16.msra.mxu0 %v83
    %101 = vmatprep.subr.bf16.mxu0 0
    %102 = vmatpush1.bf16.msra.mxu0 %v82
    %103 = vmatprep.subr.bf16.mxu0 0
    %104 = vmatpush1.bf16.msra.mxu0 %v81
    %105 = vmatprep.subr.bf16.mxu0 0
    %106 = vmatpush1.bf16.msra.mxu0 %v80
    %107 = vmatprep.subr.bf16.mxu0 0
    %108 = vmatpush1.bf16.msra.mxu0 %v79
    %109 = vmatprep.subr.bf16.mxu0 0
    %110 = vmatpush1.bf16.msra.mxu0 %v78
    %111 = vmatprep.subr.bf16.mxu0 0
    %112 = vmatpush2.bf16.msra.mxu0 0
    %113 = vmatprep.subr.bf16.mxu0 0
    %114 = vmatpush2.bf16.msra.mxu0 0
    %115 = vmatprep.subr.bf16.mxu0 0
    %116 = vmatpush2.bf16.msra.mxu0 0
    %117 = vmatprep.subr.bf16.mxu0 0
    %118 = vmatpush2.bf16.msra.mxu0 0
    %119 = vmatprep.subr.bf16.mxu0 0
    %120 = vmatpush2.bf16.msra.mxu0 0
    %121 = vmatprep.subr.bf16.mxu0 0
    %122 = vmatpush2.bf16.msra.mxu0 0
    %123 = vmatprep.subr.bf16.mxu0 0
    %124 = vmatpush2.bf16.msra.mxu0 0
    %125 = vmatprep.subr.bf16.mxu0 0
    %126 = vmatpush2.bf16.msra.mxu0 0
    %127 = vmatprep.mubr.bf16.mxu0 0
    %128 = vmatmul.mubr.bf16.gmra.mxu0 %v93
    %v129 = vpop.f32.mrf.mxu0
    %v130 = vadd.f32 %v89, %v129
    %v131 = vpop.f32.mrf.mxu0
    %v132 = vpop.f32.mrf.mxu0
    %v133 = vadd.f32 %v89, %v132
    %v134 = vpop.f32.mrf.mxu0
    %135 = vdwg.mxu0
    %v136 = vpack.c.bf16 %v130, %v130
    %v137 = vpack.c.bf16 %v133, %v133
    %139 = vrot.lane.b32.xlu0 %v136, 96
    %v140 = vpop.permute.xlu0 %139
    %vm141 = vcmask 64512
    %v143 = vsel %vm141, %v136, 0
    %v146 = vsel %vm141, %v140, 0
    %148 = vmatprep.subr.bf16.mxu0 0
    %149 = vmatpush1.bf16.xpose.msra.mxu0 0
    %150 = vmatprep.subr.bf16.mxu0 0
    %151 = vmatpush1.bf16.xpose.msra.mxu0 0
    %152 = vmatprep.subr.bf16.mxu0 0
    %153 = vmatpush1.bf16.xpose.msra.mxu0 0
    %154 = vmatprep.subr.bf16.mxu0 0
    %155 = vmatpush1.bf16.xpose.msra.mxu0 0
    %156 = vmatprep.subr.bf16.mxu0 0
    %157 = vmatpush1.bf16.xpose.msra.mxu0 0
    %158 = vmatprep.subr.bf16.mxu0 0
    %159 = vmatpush1.bf16.xpose.msra.mxu0 0
    %160 = vmatprep.subr.bf16.mxu0 0
    %161 = vmatpush1.bf16.xpose.msra.mxu0 0
    %162 = vmatprep.subr.bf16.mxu0 0
    %163 = vmatpush1.bf16.xpose.msra.mxu0 %v146
    %164 = vmatprep.subr.bf16.mxu0 0
    %165 = vmatpush2.bf16.xpose.msra.mxu0 0
    %166 = vmatprep.subr.bf16.mxu0 0
    %167 = vmatpush2.bf16.xpose.msra.mxu0 0
    %168 = vmatprep.subr.bf16.mxu0 0
    %169 = vmatpush2.bf16.xpose.msra.mxu0 0
    %170 = vmatprep.subr.bf16.mxu0 0
    %171 = vmatpush2.bf16.xpose.msra.mxu0 0
    %172 = vmatprep.subr.bf16.mxu0 0
    %173 = vmatpush2.bf16.xpose.msra.mxu0 0
    %174 = vmatprep.subr.bf16.mxu0 0
    %175 = vmatpush2.bf16.xpose.msra.mxu0 0
    %176 = vmatprep.subr.bf16.mxu0 0
    %177 = vmatpush2.bf16.xpose.msra.mxu0 0
    %178 = vmatprep.subr.bf16.mxu0 0
    %179 = vmatpush2.bf16.xpose.msra.mxu0 0
    %180 = vmatprep.mubr.bf16.mxu0 0
    %181 = vmatmul.mubr.bf16.gmra.mxu0 %v143
    %v182 = vpop.f32.mrf.mxu0
    %v183 = vadd.f32 0.0, %v182
    %v184 = vpop.f32.mrf.mxu0
    %v185 = vpop.f32.mrf.mxu0
    %v186 = vpop.f32.mrf.mxu0
    %187 = vdwg.mxu0
    %189 = vrot.lane.b32.xlu0 %v137, 96
    %v190 = vpop.permute.xlu0 %189
    %v192 = vsel %vm141, %v137, 0
    %v195 = vsel %vm141, %v190, 0
    %197 = vmatprep.subr.bf16.mxu0 0
    %198 = vmatpush1.bf16.xpose.msra.mxu0 0
    %199 = vmatprep.subr.bf16.mxu0 0
    %200 = vmatpush1.bf16.xpose.msra.mxu0 0
    %201 = vmatprep.subr.bf16.mxu0 0
    %202 = vmatpush1.bf16.xpose.msra.mxu0 0
    %203 = vmatprep.subr.bf16.mxu0 0
    %204 = vmatpush1.bf16.xpose.msra.mxu0 0
    %205 = vmatprep.subr.bf16.mxu0 0
    %206 = vmatpush1.bf16.xpose.msra.mxu0 0
    %207 = vmatprep.subr.bf16.mxu0 0
    %208 = vmatpush1.bf16.xpose.msra.mxu0 0
    %209 = vmatprep.subr.bf16.mxu0 0
    %210 = vmatpush1.bf16.xpose.msra.mxu0 0
    %211 = vmatprep.subr.bf16.mxu0 0
    %212 = vmatpush1.bf16.xpose.msra.mxu0 %v195
    %213 = vmatprep.subr.bf16.mxu0 0
    %214 = vmatpush2.bf16.xpose.msra.mxu0 0
    %215 = vmatprep.subr.bf16.mxu0 0
    %216 = vmatpush2.bf16.xpose.msra.mxu0 0
    %217 = vmatprep.subr.bf16.mxu0 0
    %218 = vmatpush2.bf16.xpose.msra.mxu0 0
    %219 = vmatprep.subr.bf16.mxu0 0
    %220 = vmatpush2.bf16.xpose.msra.mxu0 0
    %221 = vmatprep.subr.bf16.mxu0 0
    %222 = vmatpush2.bf16.xpose.msra.mxu0 0
    %223 = vmatprep.subr.bf16.mxu0 0
    %224 = vmatpush2.bf16.xpose.msra.mxu0 0
    %225 = vmatprep.subr.bf16.mxu0 0
    %226 = vmatpush2.bf16.xpose.msra.mxu0 0
    %227 = vmatprep.subr.bf16.mxu0 0
    %228 = vmatpush2.bf16.xpose.msra.mxu0 0
    %229 = vmatprep.mubr.bf16.mxu0 0
    %230 = vmatmul.mubr.bf16.gmra.mxu0 %v192
    %v231 = vpop.f32.mrf.mxu0
    %v232 = vadd.f32 0.0, %v231
    %v233 = vpop.f32.mrf.mxu0
    %v234 = vpop.f32.mrf.mxu0
    %v235 = vpop.f32.mrf.mxu0
    %236 = vdwg.mxu0
    %v237 = vsel %vm141, %v183, -inf
    %238 = vmax.xlane.f32.xlu0 %v237
    %v239 = vpop.xlane.xlu0 %238
    %v240 = vsel %vm141, %v232, -inf
    %241 = vmax.xlane.f32.xlu0 %v240
    %v242 = vpop.xlane.xlu0 %241
    %v243 = vsub.f32 %v183, %v239
    %v244 = vsub.f32 %v232, %v242
    %v245 = vmul.f32 %v243, 1.442695
    %v246 = vpow.pop %v245
    %v247 = vmul.f32 %v244, 1.442695
    %v248 = vpow.pop %v247
    %v249 = vsel %vm141, %v246, 0.0
    %250 = vadd.xlane.f32.xlu0 %v249
    %v251 = vpop.xlane.xlu0 %250
    %v252 = vsel %vm141, %v248, 0.0
    %253 = vadd.xlane.f32.xlu0 %v252
    %v254 = vpop.xlane.xlu0 %253
    %v255 = vrcp.pop %v251
    %v256 = vrcp.pop %v254
    %v257 = vmul.f32 %v246, %v255
    %v258 = vmul.f32 %v248, %v256
    %v259 = vpack.c.bf16 %v257, %v257
    %v260 = vpack.c.bf16 %v258, %v258
    %261 = vrot.lane.b32.xlu0 %v136, 64
    %v262 = vpop.permute.xlu0 %261
    %v264 = vsel %vm141, %v259, 0
    %vm266 = vcmask 1043456
    %v268 = vsel %vm266, %v262, 0
    %270 = vmatprep.subr.bf16.mxu0 0
    %271 = vmatpush1.bf16.msra.mxu0 0
    %272 = vmatprep.subr.bf16.mxu0 0
    %273 = vmatpush1.bf16.msra.mxu0 0
    %274 = vmatprep.subr.bf16.mxu0 0
    %275 = vmatpush1.bf16.msra.mxu0 0
    %276 = vmatprep.subr.bf16.mxu0 0
    %277 = vmatpush1.bf16.msra.mxu0 0
    %278 = vmatprep.subr.bf16.mxu0 0
    %279 = vmatpush1.bf16.msra.mxu0 0
    %280 = vmatprep.subr.bf16.mxu0 0
    %281 = vmatpush1.bf16.msra.mxu0 0
    %282 = vmatprep.subr.bf16.mxu0 0
    %283 = vmatpush1.bf16.msra.mxu0 0
    %284 = vmatprep.subr.bf16.mxu0 0
    %285 = vmatpush1.bf16.msra.mxu0 %v268
    %286 = vmatprep.subr.bf16.mxu0 0
    %287 = vmatpush2.bf16.msra.mxu0 0
    %288 = vmatprep.subr.bf16.mxu0 0
    %289 = vmatpush2.bf16.msra.mxu0 0
    %290 = vmatprep.subr.bf16.mxu0 0
    %291 = vmatpush2.bf16.msra.mxu0 0
    %292 = vmatprep.subr.bf16.mxu0 0
    %293 = vmatpush2.bf16.msra.mxu0 0
    %294 = vmatprep.subr.bf16.mxu0 0
    %295 = vmatpush2.bf16.msra.mxu0 0
    %296 = vmatprep.subr.bf16.mxu0 0
    %297 = vmatpush2.bf16.msra.mxu0 0
    %298 = vmatprep.subr.bf16.mxu0 0
    %299 = vmatpush2.bf16.msra.mxu0 0
    %300 = vmatprep.subr.bf16.mxu0 0
    %301 = vmatpush2.bf16.msra.mxu0 0
    %302 = vmatprep.mubr.bf16.mxu0 0
    %303 = vmatmul.mubr.bf16.gmra.mxu0 %v264
    %v304 = vpop.f32.mrf.mxu0
    %v305 = vadd.f32 0.0, %v304
    %v306 = vpop.f32.mrf.mxu0
    %v307 = vpop.f32.mrf.mxu0
    %v308 = vpop.f32.mrf.mxu0
    %309 = vdwg.mxu0
    %310 = vrot.lane.b32.xlu0 %v137, 64
    %v311 = vpop.permute.xlu0 %310
    %v313 = vsel %vm141, %v260, 0
    %v316 = vsel %vm266, %v311, 0
    %318 = vmatprep.subr.bf16.mxu0 0
    %319 = vmatpush1.bf16.msra.mxu0 0
    %320 = vmatprep.subr.bf16.mxu0 0
    %321 = vmatpush1.bf16.msra.mxu0 0
    %322 = vmatprep.subr.bf16.mxu0 0
    %323 = vmatpush1.bf16.msra.mxu0 0
    %324 = vmatprep.subr.bf16.mxu0 0
    %325 = vmatpush1.bf16.msra.mxu0 0
    %326 = vmatprep.subr.bf16.mxu0 0
    %327 = vmatpush1.bf16.msra.mxu0 0
    %328 = vmatprep.subr.bf16.mxu0 0
    %329 = vmatpush1.bf16.msra.mxu0 0
    %330 = vmatprep.subr.bf16.mxu0 0
    %331 = vmatpush1.bf16.msra.mxu0 0
    %332 = vmatprep.subr.bf16.mxu0 0
    %333 = vmatpush1.bf16.msra.mxu0 %v316
    %334 = vmatprep.subr.bf16.mxu0 0
    %335 = vmatpush2.bf16.msra.mxu0 0
    %336 = vmatprep.subr.bf16.mxu0 0
    %337 = vmatpush2.bf16.msra.mxu0 0
    %338 = vmatprep.subr.bf16.mxu0 0
    %339 = vmatpush2.bf16.msra.mxu0 0
    %340 = vmatprep.subr.bf16.mxu0 0
    %341 = vmatpush2.bf16.msra.mxu0 0
    %342 = vmatprep.subr.bf16.mxu0 0
    %343 = vmatpush2.bf16.msra.mxu0 0
    %344 = vmatprep.subr.bf16.mxu0 0
    %345 = vmatpush2.bf16.msra.mxu0 0
    %346 = vmatprep.subr.bf16.mxu0 0
    %347 = vmatpush2.bf16.msra.mxu0 0
    %348 = vmatprep.subr.bf16.mxu0 0
    %349 = vmatpush2.bf16.msra.mxu0 0
    %350 = vmatprep.mubr.bf16.mxu0 0
    %351 = vmatmul.mubr.bf16.gmra.mxu0 %v313
    %v352 = vpop.f32.mrf.mxu0
    %v353 = vadd.f32 0.0, %v352
    %v354 = vpop.f32.mrf.mxu0
    %v355 = vpop.f32.mrf.mxu0
    %v356 = vpop.f32.mrf.mxu0
    %357 = vdwg.mxu0
    %v358 = vld [vmem:[#allocation7] sm:$0xff]
    %v359 = vpack.c.bf16 %v358, %v358
    %v360 = vpack.c.bf16 %v353, %v305
    %361 = vrot.lane.b32.xlu0 %v136, 120
    %v362 = vpop.permute.xlu0 %361
    %363 = vrot.lane.b32.xlu0 %v136, 88
    %v364 = vpop.permute.xlu0 %363
    %v366 = vsel %vm141, %v362, 0
    %v369 = vsel %vm141, %v364, 0
    %371 = vmatprep.subr.bf16.mxu0 0
    %372 = vmatpush1.bf16.xpose.msra.mxu0 0
    %373 = vmatprep.subr.bf16.mxu0 0
    %374 = vmatpush1.bf16.xpose.msra.mxu0 0
    %375 = vmatprep.subr.bf16.mxu0 0
    %376 = vmatpush1.bf16.xpose.msra.mxu0 0
    %377 = vmatprep.subr.bf16.mxu0 0
    %378 = vmatpush1.bf16.xpose.msra.mxu0 0
    %379 = vmatprep.subr.bf16.mxu0 0
    %380 = vmatpush1.bf16.xpose.msra.mxu0 0
    %381 = vmatprep.subr.bf16.mxu0 0
    %382 = vmatpush1.bf16.xpose.msra.mxu0 0
    %383 = vmatprep.subr.bf16.mxu0 0
    %384 = vmatpush1.bf16.xpose.msra.mxu0 0
    %385 = vmatprep.subr.bf16.mxu0 0
    %386 = vmatpush1.bf16.xpose.msra.mxu0 %v369
    %387 = vmatprep.subr.bf16.mxu0 0
    %388 = vmatpush2.bf16.xpose.msra.mxu0 0
    %389 = vmatprep.subr.bf16.mxu0 0
    %390 = vmatpush2.bf16.xpose.msra.mxu0 0
    %391 = vmatprep.subr.bf16.mxu0 0
    %392 = vmatpush2.bf16.xpose.msra.mxu0 0
    %393 = vmatprep.subr.bf16.mxu0 0
    %394 = vmatpush2.bf16.xpose.msra.mxu0 0
    %395 = vmatprep.subr.bf16.mxu0 0
    %396 = vmatpush2.bf16.xpose.msra.mxu0 0
    %397 = vmatprep.subr.bf16.mxu0 0
    %398 = vmatpush2.bf16.xpose.msra.mxu0 0
    %399 = vmatprep.subr.bf16.mxu0 0
    %400 = vmatpush2.bf16.xpose.msra.mxu0 0
    %401 = vmatprep.subr.bf16.mxu0 0
    %402 = vmatpush2.bf16.xpose.msra.mxu0 0
    %403 = vmatprep.mubr.bf16.mxu0 0
    %404 = vmatmul.mubr.bf16.gmra.mxu0 %v366
    %v405 = vpop.f32.mrf.mxu0
    %v406 = vadd.f32 0.0, %v405
    %v407 = vpop.f32.mrf.mxu0
    %v408 = vpop.f32.mrf.mxu0
    %v409 = vpop.f32.mrf.mxu0
    %410 = vdwg.mxu0
    %411 = vrot.lane.b32.xlu0 %v137, 120
    %v412 = vpop.permute.xlu0 %411
    %413 = vrot.lane.b32.xlu0 %v137, 88
    %v414 = vpop.permute.xlu0 %413
    %v416 = vsel %vm141, %v412, 0
    %v419 = vsel %vm141, %v414, 0
    %421 = vmatprep.subr.bf16.mxu0 0
    %422 = vmatpush1.bf16.xpose.msra.mxu0 0
    %423 = vmatprep.subr.bf16.mxu0 0
    %424 = vmatpush1.bf16.xpose.msra.mxu0 0
    %425 = vmatprep.subr.bf16.mxu0 0
    %426 = vmatpush1.bf16.xpose.msra.mxu0 0
    %427 = vmatprep.subr.bf16.mxu0 0
    %428 = vmatpush1.bf16.xpose.msra.mxu0 0
    %429 = vmatprep.subr.bf16.mxu0 0
    %430 = vmatpush1.bf16.xpose.msra.mxu0 0
    %431 = vmatprep.subr.bf16.mxu0 0
    %432 = vmatpush1.bf16.xpose.msra.mxu0 0
    %433 = vmatprep.subr.bf16.mxu0 0
    %434 = vmatpush1.bf16.xpose.msra.mxu0 0
    %435 = vmatprep.subr.bf16.mxu0 0
    %436 = vmatpush1.bf16.xpose.msra.mxu0 %v419
    %437 = vmatprep.subr.bf16.mxu0 0
    %438 = vmatpush2.bf16.xpose.msra.mxu0 0
    %439 = vmatprep.subr.bf16.mxu0 0
    %440 = vmatpush2.bf16.xpose.msra.mxu0 0
    %441 = vmatprep.subr.bf16.mxu0 0
    %442 = vmatpush2.bf16.xpose.msra.mxu0 0
    %443 = vmatprep.subr.bf16.mxu0 0
    %444 = vmatpush2.bf16.xpose.msra.mxu0 0
    %445 = vmatprep.subr.bf16.mxu0 0
    %446 = vmatpush2.bf16.xpose.msra.mxu0 0
    %447 = vmatprep.subr.bf16.mxu0 0
    %448 = vmatpush2.bf16.xpose.msra.mxu0 0
    %449 = vmatprep.subr.bf16.mxu0 0
    %450 = vmatpush2.bf16.xpose.msra.mxu0 0
    %451 = vmatprep.subr.bf16.mxu0 0
    %452 = vmatpush2.bf16.xpose.msra.mxu0 0
    %453 = vmatprep.mubr.bf16.mxu0 0
    %454 = vmatmul.mubr.bf16.gmra.mxu0 %v416
    %v455 = vpop.f32.mrf.mxu0
    %v456 = vadd.f32 0.0, %v455
    %v457 = vpop.f32.mrf.mxu0
    %v458 = vpop.f32.mrf.mxu0
    %v459 = vpop.f32.mrf.mxu0
    %460 = vdwg.mxu0
    %v461 = vsel %vm141, %v406, -inf
    %462 = vmax.xlane.f32.xlu0 %v461
    %v463 = vpop.xlane.xlu0 %462
    %v464 = vsel %vm141, %v456, -inf
    %465 = vmax.xlane.f32.xlu0 %v464
    %v466 = vpop.xlane.xlu0 %465
    %v467 = vsub.f32 %v406, %v463
    %v468 = vsub.f32 %v456, %v466
    %v469 = vmul.f32 %v467, 1.442695
    %v470 = vpow.pop %v469
    %v471 = vmul.f32 %v468, 1.442695
    %v472 = vpow.pop %v471
    %v473 = vsel %vm141, %v470, 0.0
    %474 = vadd.xlane.f32.xlu0 %v473
    %v475 = vpop.xlane.xlu0 %474
    %v476 = vsel %vm141, %v472, 0.0
    %477 = vadd.xlane.f32.xlu0 %v476
    %v478 = vpop.xlane.xlu0 %477
    %v479 = vrcp.pop %v475
    %v480 = vrcp.pop %v478
    %v481 = vmul.f32 %v470, %v479
    %v482 = vmul.f32 %v472, %v480
    %v483 = vpack.c.bf16 %v481, %v481
    %v484 = vpack.c.bf16 %v482, %v482
    %485 = vrot.lane.b32.xlu0 %v136, 56
    %v486 = vpop.permute.xlu0 %485
    %v488 = vsel %vm141, %v483, 0
    %v491 = vsel %vm266, %v486, 0
    %493 = vmatprep.subr.bf16.mxu0 0
    %494 = vmatpush1.bf16.msra.mxu0 0
    %495 = vmatprep.subr.bf16.mxu0 0
    %496 = vmatpush1.bf16.msra.mxu0 0
    %497 = vmatprep.subr.bf16.mxu0 0
    %498 = vmatpush1.bf16.msra.mxu0 0
    %499 = vmatprep.subr.bf16.mxu0 0
    %500 = vmatpush1.bf16.msra.mxu0 0
    %501 = vmatprep.subr.bf16.mxu0 0
    %502 = vmatpush1.bf16.msra.mxu0 0
    %503 = vmatprep.subr.bf16.mxu0 0
    %504 = vmatpush1.bf16.msra.mxu0 0
    %505 = vmatprep.subr.bf16.mxu0 0
    %506 = vmatpush1.bf16.msra.mxu0 0
    %507 = vmatprep.subr.bf16.mxu0 0
    %508 = vmatpush1.bf16.msra.mxu0 %v491
    %509 = vmatprep.subr.bf16.mxu0 0
    %510 = vmatpush2.bf16.msra.mxu0 0
    %511 = vmatprep.subr.bf16.mxu0 0
    %512 = vmatpush2.bf16.msra.mxu0 0
    %513 = vmatprep.subr.bf16.mxu0 0
    %514 = vmatpush2.bf16.msra.mxu0 0
    %515 = vmatprep.subr.bf16.mxu0 0
    %516 = vmatpush2.bf16.msra.mxu0 0
    %517 = vmatprep.subr.bf16.mxu0 0
    %518 = vmatpush2.bf16.msra.mxu0 0
    %519 = vmatprep.subr.bf16.mxu0 0
    %520 = vmatpush2.bf16.msra.mxu0 0
    %521 = vmatprep.subr.bf16.mxu0 0
    %522 = vmatpush2.bf16.msra.mxu0 0
    %523 = vmatprep.subr.bf16.mxu0 0
    %524 = vmatpush2.bf16.msra.mxu0 0
    %525 = vmatprep.mubr.bf16.mxu0 0
    %526 = vmatmul.mubr.bf16.gmra.mxu0 %v488
    %v527 = vpop.f32.mrf.mxu0
    %v528 = vadd.f32 0.0, %v527
    %v529 = vpop.f32.mrf.mxu0
    %v530 = vpop.f32.mrf.mxu0
    %v531 = vpop.f32.mrf.mxu0
    %532 = vdwg.mxu0
    %533 = vrot.lane.b32.xlu0 %v137, 56
    %v534 = vpop.permute.xlu0 %533
    %v536 = vsel %vm141, %v484, 0
    %v539 = vsel %vm266, %v534, 0
    %541 = vmatprep.subr.bf16.mxu0 0
    %542 = vmatpush1.bf16.msra.mxu0 0
    %543 = vmatprep.subr.bf16.mxu0 0
    %544 = vmatpush1.bf16.msra.mxu0 0
    %545 = vmatprep.subr.bf16.mxu0 0
    %546 = vmatpush1.bf16.msra.mxu0 0
    %547 = vmatprep.subr.bf16.mxu0 0
    %548 = vmatpush1.bf16.msra.mxu0 0
    %549 = vmatprep.subr.bf16.mxu0 0
    %550 = vmatpush1.bf16.msra.mxu0 0
    %551 = vmatprep.subr.bf16.mxu0 0
    %552 = vmatpush1.bf16.msra.mxu0 0
    %553 = vmatprep.subr.bf16.mxu0 0
    %554 = vmatpush1.bf16.msra.mxu0 0
    %555 = vmatprep.subr.bf16.mxu0 0
    %556 = vmatpush1.bf16.msra.mxu0 %v539
    %557 = vmatprep.subr.bf16.mxu0 0
    %558 = vmatpush2.bf16.msra.mxu0 0
    %559 = vmatprep.subr.bf16.mxu0 0
    %560 = vmatpush2.bf16.msra.mxu0 0
    %561 = vmatprep.subr.bf16.mxu0 0
    %562 = vmatpush2.bf16.msra.mxu0 0
    %563 = vmatprep.subr.bf16.mxu0 0
    %564 = vmatpush2.bf16.msra.mxu0 0
    %565 = vmatprep.subr.bf16.mxu0 0
    %566 = vmatpush2.bf16.msra.mxu0 0
    %567 = vmatprep.subr.bf16.mxu0 0
    %568 = vmatpush2.bf16.msra.mxu0 0
    %569 = vmatprep.subr.bf16.mxu0 0
    %570 = vmatpush2.bf16.msra.mxu0 0
    %571 = vmatprep.subr.bf16.mxu0 0
    %572 = vmatpush2.bf16.msra.mxu0 0
    %573 = vmatprep.mubr.bf16.mxu0 0
    %574 = vmatmul.mubr.bf16.gmra.mxu0 %v536
    %v575 = vpop.f32.mrf.mxu0
    %v576 = vadd.f32 0.0, %v575
    %v577 = vpop.f32.mrf.mxu0
    %v578 = vpop.f32.mrf.mxu0
    %v579 = vpop.f32.mrf.mxu0
    %580 = vdwg.mxu0
    %v581 = vld [vmem:[#allocation7 + $0x8] sm:$0xff]
    %v582 = vpack.c.bf16 %v581, %v581
    %v583 = vpack.c.bf16 %v576, %v528
    %v585 = vsel %vm141, %v583, 0
    %v588 = vsel %vm266, %v582, 0
    %590 = vmatprep.subr.bf16.mxu0 0
    %591 = vmatpush1.bf16.msra.mxu0 0
    %592 = vmatprep.subr.bf16.mxu0 0
    %593 = vmatpush1.bf16.msra.mxu0 0
    %594 = vmatprep.subr.bf16.mxu0 0
    %595 = vmatpush1.bf16.msra.mxu0 0
    %596 = vmatprep.subr.bf16.mxu0 0
    %597 = vmatpush1.bf16.msra.mxu0 0
    %598 = vmatprep.subr.bf16.mxu0 0
    %599 = vmatpush1.bf16.msra.mxu0 0
    %600 = vmatprep.subr.bf16.mxu0 0
    %601 = vmatpush1.bf16.msra.mxu0 0
    %602 = vmatprep.subr.bf16.mxu0 0
    %603 = vmatpush1.bf16.msra.mxu0 0
    %604 = vmatprep.subr.bf16.mxu0 0
    %605 = vmatpush1.bf16.msra.mxu0 %v588
    %606 = vmatprep.subr.bf16.mxu0 0
    %607 = vmatpush2.bf16.msra.mxu0 0
    %608 = vmatprep.subr.bf16.mxu0 0
    %609 = vmatpush2.bf16.msra.mxu0 0
    %610 = vmatprep.subr.bf16.mxu0 0
    %611 = vmatpush2.bf16.msra.mxu0 0
    %612 = vmatprep.subr.bf16.mxu0 0
    %613 = vmatpush2.bf16.msra.mxu0 0
    %614 = vmatprep.subr.bf16.mxu0 0
    %615 = vmatpush2.bf16.msra.mxu0 0
    %616 = vmatprep.subr.bf16.mxu0 0
    %617 = vmatpush2.bf16.msra.mxu0 0
    %618 = vmatprep.subr.bf16.mxu0 0
    %619 = vmatpush2.bf16.msra.mxu0 0
    %620 = vmatprep.subr.bf16.mxu0 0
    %621 = vmatpush2.bf16.msra.mxu0 0
    %622 = vmatprep.mubr.bf16.mxu0 0
    %623 = vmatmul.mubr.bf16.gmra.mxu0 %v585
    %v624 = vpop.f32.mrf.mxu0
    %v625 = vadd.f32 0.0, %v624
    %v626 = vpop.f32.mrf.mxu0
    %v627 = vpop.f32.mrf.mxu0
    %v628 = vadd.f32 0.0, %v627
    %v629 = vpop.f32.mrf.mxu0
    %630 = vdwg.mxu0
    %v632 = vsel %vm141, %v360, 0
    %v635 = vsel %vm266, %v359, 0
    %637 = vmatprep.subr.bf16.mxu0 0
    %638 = vmatpush1.bf16.msra.mxu0 0
    %639 = vmatprep.subr.bf16.mxu0 0
    %640 = vmatpush1.bf16.msra.mxu0 0
    %641 = vmatprep.subr.bf16.mxu0 0
    %642 = vmatpush1.bf16.msra.mxu0 0
    %643 = vmatprep.subr.bf16.mxu0 0
    %644 = vmatpush1.bf16.msra.mxu0 0
    %645 = vmatprep.subr.bf16.mxu0 0
    %646 = vmatpush1.bf16.msra.mxu0 0
    %647 = vmatprep.subr.bf16.mxu0 0
    %648 = vmatpush1.bf16.msra.mxu0 0
    %649 = vmatprep.subr.bf16.mxu0 0
    %650 = vmatpush1.bf16.msra.mxu0 0
    %651 = vmatprep.subr.bf16.mxu0 0
    %652 = vmatpush1.bf16.msra.mxu0 %v635
    %653 = vmatprep.subr.bf16.mxu0 0
    %654 = vmatpush2.bf16.msra.mxu0 0
    %655 = vmatprep.subr.bf16.mxu0 0
    %656 = vmatpush2.bf16.msra.mxu0 0
    %657 = vmatprep.subr.bf16.mxu0 0
    %658 = vmatpush2.bf16.msra.mxu0 0
    %659 = vmatprep.subr.bf16.mxu0 0
    %660 = vmatpush2.bf16.msra.mxu0 0
    %661 = vmatprep.subr.bf16.mxu0 0
    %662 = vmatpush2.bf16.msra.mxu0 0
    %663 = vmatprep.subr.bf16.mxu0 0
    %664 = vmatpush2.bf16.msra.mxu0 0
    %665 = vmatprep.subr.bf16.mxu0 0
    %666 = vmatpush2.bf16.msra.mxu0 0
    %667 = vmatprep.subr.bf16.mxu0 0
    %668 = vmatpush2.bf16.msra.mxu0 0
    %669 = vmatprep.mubr.bf16.mxu0 0
    %670 = vmatmul.mubr.bf16.gmra.mxu0 %v632
    %v671 = vpop.f32.mrf.mxu0
    %v672 = vadd.f32 %v625, %v671
    %v673 = vpop.f32.mrf.mxu0
    %v674 = vpop.f32.mrf.mxu0
    %v675 = vadd.f32 %v628, %v674
    %v676 = vpop.f32.mrf.mxu0
    %677 = vdwg.mxu0
    %678 = vrot.lane.b32.xlu0 %v136, 112
    %v679 = vpop.permute.xlu0 %678
    %680 = vrot.lane.b32.xlu0 %v136, 80
    %v681 = vpop.permute.xlu0 %680
    %v683 = vsel %vm141, %v679, 0
    %v686 = vsel %vm141, %v681, 0
    %688 = vmatprep.subr.bf16.mxu0 0
    %689 = vmatpush1.bf16.xpose.msra.mxu0 0
    %690 = vmatprep.subr.bf16.mxu0 0
    %691 = vmatpush1.bf16.xpose.msra.mxu0 0
    %692 = vmatprep.subr.bf16.mxu0 0
    %693 = vmatpush1.bf16.xpose.msra.mxu0 0
    %694 = vmatprep.subr.bf16.mxu0 0
    %695 = vmatpush1.bf16.xpose.msra.mxu0 0
    %696 = vmatprep.subr.bf16.mxu0 0
    %697 = vmatpush1.bf16.xpose.msra.mxu0 0
    %698 = vmatprep.subr.bf16.mxu0 0
    %699 = vmatpush1.bf16.xpose.msra.mxu0 0
    %700 = vmatprep.subr.bf16.mxu0 0
    %701 = vmatpush1.bf16.xpose.msra.mxu0 0
    %702 = vmatprep.subr.bf16.mxu0 0
    %703 = vmatpush1.bf16.xpose.msra.mxu0 %v686
    %704 = vmatprep.subr.bf16.mxu0 0
    %705 = vmatpush2.bf16.xpose.msra.mxu0 0
    %706 = vmatprep.subr.bf16.mxu0 0
    %707 = vmatpush2.bf16.xpose.msra.mxu0 0
    %708 = vmatprep.subr.bf16.mxu0 0
    %709 = vmatpush2.bf16.xpose.msra.mxu0 0
    %710 = vmatprep.subr.bf16.mxu0 0
    %711 = vmatpush2.bf16.xpose.msra.mxu0 0
    %712 = vmatprep.subr.bf16.mxu0 0
    %713 = vmatpush2.bf16.xpose.msra.mxu0 0
    %714 = vmatprep.subr.bf16.mxu0 0
    %715 = vmatpush2.bf16.xpose.msra.mxu0 0
    %716 = vmatprep.subr.bf16.mxu0 0
    %717 = vmatpush2.bf16.xpose.msra.mxu0 0
    %718 = vmatprep.subr.bf16.mxu0 0
    %719 = vmatpush2.bf16.xpose.msra.mxu0 0
    %720 = vmatprep.mubr.bf16.mxu0 0
    %721 = vmatmul.mubr.bf16.gmra.mxu0 %v683
    %v722 = vpop.f32.mrf.mxu0
    %v723 = vadd.f32 0.0, %v722
    %v724 = vpop.f32.mrf.mxu0
    %v725 = vpop.f32.mrf.mxu0
    %v726 = vpop.f32.mrf.mxu0
    %727 = vdwg.mxu0
    %728 = vrot.lane.b32.xlu0 %v137, 112
    %v729 = vpop.permute.xlu0 %728
    %730 = vrot.lane.b32.xlu0 %v137, 80
    %v731 = vpop.permute.xlu0 %730
    %v733 = vsel %vm141, %v729, 0
    %v736 = vsel %vm141, %v731, 0
    %738 = vmatprep.subr.bf16.mxu0 0
    %739 = vmatpush1.bf16.xpose.msra.mxu0 0
    %740 = vmatprep.subr.bf16.mxu0 0
    %741 = vmatpush1.bf16.xpose.msra.mxu0 0
    %742 = vmatprep.subr.bf16.mxu0 0
    %743 = vmatpush1.bf16.xpose.msra.mxu0 0
    %744 = vmatprep.subr.bf16.mxu0 0
    %745 = vmatpush1.bf16.xpose.msra.mxu0 0
    %746 = vmatprep.subr.bf16.mxu0 0
    %747 = vmatpush1.bf16.xpose.msra.mxu0 0
    %748 = vmatprep.subr.bf16.mxu0 0
    %749 = vmatpush1.bf16.xpose.msra.mxu0 0
    %750 = vmatprep.subr.bf16.mxu0 0
    %751 = vmatpush1.bf16.xpose.msra.mxu0 0
    %752 = vmatprep.subr.bf16.mxu0 0
    %753 = vmatpush1.bf16.xpose.msra.mxu0 %v736
    %754 = vmatprep.subr.bf16.mxu0 0
    %755 = vmatpush2.bf16.xpose.msra.mxu0 0
    %756 = vmatprep.subr.bf16.mxu0 0
    %757 = vmatpush2.bf16.xpose.msra.mxu0 0
    %758 = vmatprep.subr.bf16.mxu0 0
    %759 = vmatpush2.bf16.xpose.msra.mxu0 0
    %760 = vmatprep.subr.bf16.mxu0 0
    %761 = vmatpush2.bf16.xpose.msra.mxu0 0
    %762 = vmatprep.subr.bf16.mxu0 0
    %763 = vmatpush2.bf16.xpose.msra.mxu0 0
    %764 = vmatprep.subr.bf16.mxu0 0
    %765 = vmatpush2.bf16.xpose.msra.mxu0 0
    %766 = vmatprep.subr.bf16.mxu0 0
    %767 = vmatpush2.bf16.xpose.msra.mxu0 0
    %768 = vmatprep.subr.bf16.mxu0 0
    %769 = vmatpush2.bf16.xpose.msra.mxu0 0
    %770 = vmatprep.mubr.bf16.mxu0 0
    %771 = vmatmul.mubr.bf16.gmra.mxu0 %v733
    %v772 = vpop.f32.mrf.mxu0
    %v773 = vadd.f32 0.0, %v772
    %v774 = vpop.f32.mrf.mxu0
    %v775 = vpop.f32.mrf.mxu0
    %v776 = vpop.f32.mrf.mxu0
    %777 = vdwg.mxu0
    %v778 = vsel %vm141, %v723, -inf
    %779 = vmax.xlane.f32.xlu0 %v778
    %v780 = vpop.xlane.xlu0 %779
    %v781 = vsel %vm141, %v773, -inf
    %782 = vmax.xlane.f32.xlu0 %v781
    %v783 = vpop.xlane.xlu0 %782
    %v784 = vsub.f32 %v723, %v780
    %v785 = vsub.f32 %v773, %v783
    %v786 = vmul.f32 %v784, 1.442695
    %v787 = vpow.pop %v786
    %v788 = vmul.f32 %v785, 1.442695
    %v789 = vpow.pop %v788
    %v790 = vsel %vm141, %v787, 0.0
    %791 = vadd.xlane.f32.xlu0 %v790
    %v792 = vpop.xlane.xlu0 %791
    %v793 = vsel %vm141, %v789, 0.0
    %794 = vadd.xlane.f32.xlu0 %v793
    %v795 = vpop.xlane.xlu0 %794
    %v796 = vrcp.pop %v792
    %v797 = vrcp.pop %v795
    %v798 = vmul.f32 %v787, %v796
    %v799 = vmul.f32 %v789, %v797
    %v800 = vpack.c.bf16 %v798, %v798
    %v801 = vpack.c.bf16 %v799, %v799
    %802 = vrot.lane.b32.xlu0 %v136, 48
    %v803 = vpop.permute.xlu0 %802
    %v805 = vsel %vm141, %v800, 0
    %v808 = vsel %vm266, %v803, 0
    %810 = vmatprep.subr.bf16.mxu0 0
    %811 = vmatpush1.bf16.msra.mxu0 0
    %812 = vmatprep.subr.bf16.mxu0 0
    %813 = vmatpush1.bf16.msra.mxu0 0
    %814 = vmatprep.subr.bf16.mxu0 0
    %815 = vmatpush1.bf16.msra.mxu0 0
    %816 = vmatprep.subr.bf16.mxu0 0
    %817 = vmatpush1.bf16.msra.mxu0 0
    %818 = vmatprep.subr.bf16.mxu0 0
    %819 = vmatpush1.bf16.msra.mxu0 0
    %820 = vmatprep.subr.bf16.mxu0 0
    %821 = vmatpush1.bf16.msra.mxu0 0
    %822 = vmatprep.subr.bf16.mxu0 0
    %823 = vmatpush1.bf16.msra.mxu0 0
    %824 = vmatprep.subr.bf16.mxu0 0
    %825 = vmatpush1.bf16.msra.mxu0 %v808
    %826 = vmatprep.subr.bf16.mxu0 0
    %827 = vmatpush2.bf16.msra.mxu0 0
    %828 = vmatprep.subr.bf16.mxu0 0
    %829 = vmatpush2.bf16.msra.mxu0 0
    %830 = vmatprep.subr.bf16.mxu0 0
    %831 = vmatpush2.bf16.msra.mxu0 0
    %832 = vmatprep.subr.bf16.mxu0 0
    %833 = vmatpush2.bf16.msra.mxu0 0
    %834 = vmatprep.subr.bf16.mxu0 0
    %835 = vmatpush2.bf16.msra.mxu0 0
    %836 = vmatprep.subr.bf16.mxu0 0
    %837 = vmatpush2.bf16.msra.mxu0 0
    %838 = vmatprep.subr.bf16.mxu0 0
    %839 = vmatpush2.bf16.msra.mxu0 0
    %840 = vmatprep.subr.bf16.mxu0 0
    %841 = vmatpush2.bf16.msra.mxu0 0
    %842 = vmatprep.mubr.bf16.mxu0 0
    %843 = vmatmul.mubr.bf16.gmra.mxu0 %v805
    %v844 = vpop.f32.mrf.mxu0
    %v845 = vadd.f32 0.0, %v844
    %v846 = vpop.f32.mrf.mxu0
    %v847 = vpop.f32.mrf.mxu0
    %v848 = vpop.f32.mrf.mxu0
    %849 = vdwg.mxu0
    %850 = vrot.lane.b32.xlu0 %v137, 48
    %v851 = vpop.permute.xlu0 %850
    %v853 = vsel %vm141, %v801, 0
    %v856 = vsel %vm266, %v851, 0
    %858 = vmatprep.subr.bf16.mxu0 0
    %859 = vmatpush1.bf16.msra.mxu0 0
    %860 = vmatprep.subr.bf16.mxu0 0
    %861 = vmatpush1.bf16.msra.mxu0 0
    %862 = vmatprep.subr.bf16.mxu0 0
    %863 = vmatpush1.bf16.msra.mxu0 0
    %864 = vmatprep.subr.bf16.mxu0 0
    %865 = vmatpush1.bf16.msra.mxu0 0
    %866 = vmatprep.subr.bf16.mxu0 0
    %867 = vmatpush1.bf16.msra.mxu0 0
    %868 = vmatprep.subr.bf16.mxu0 0
    %869 = vmatpush1.bf16.msra.mxu0 0
    %870 = vmatprep.subr.bf16.mxu0 0
    %871 = vmatpush1.bf16.msra.mxu0 0
    %872 = vmatprep.subr.bf16.mxu0 0
    %873 = vmatpush1.bf16.msra.mxu0 %v856
    %874 = vmatprep.subr.bf16.mxu0 0
    %875 = vmatpush2.bf16.msra.mxu0 0
    %876 = vmatprep.subr.bf16.mxu0 0
    %877 = vmatpush2.bf16.msra.mxu0 0
    %878 = vmatprep.subr.bf16.mxu0 0
    %879 = vmatpush2.bf16.msra.mxu0 0
    %880 = vmatprep.subr.bf16.mxu0 0
    %881 = vmatpush2.bf16.msra.mxu0 0
    %882 = vmatprep.subr.bf16.mxu0 0
    %883 = vmatpush2.bf16.msra.mxu0 0
    %884 = vmatprep.subr.bf16.mxu0 0
    %885 = vmatpush2.bf16.msra.mxu0 0
    %886 = vmatprep.subr.bf16.mxu0 0
    %887 = vmatpush2.bf16.msra.mxu0 0
    %888 = vmatprep.subr.bf16.mxu0 0
    %889 = vmatpush2.bf16.msra.mxu0 0
    %890 = vmatprep.mubr.bf16.mxu0 0
    %891 = vmatmul.mubr.bf16.gmra.mxu0 %v853
    %v892 = vpop.f32.mrf.mxu0
    %v893 = vadd.f32 0.0, %v892
    %v894 = vpop.f32.mrf.mxu0
    %v895 = vpop.f32.mrf.mxu0
    %v896 = vpop.f32.mrf.mxu0
    %897 = vdwg.mxu0
    %v898 = vld [vmem:[#allocation7 + $0x10] sm:$0xff]
    %v899 = vpack.c.bf16 %v898, %v898
    %v900 = vpack.c.bf16 %v893, %v845
    %v902 = vsel %vm141, %v900, 0
    %v905 = vsel %vm266, %v899, 0
    %907 = vmatprep.subr.bf16.mxu0 0
    %908 = vmatpush1.bf16.msra.mxu0 0
    %909 = vmatprep.subr.bf16.mxu0 0
    %910 = vmatpush1.bf16.msra.mxu0 0
    %911 = vmatprep.subr.bf16.mxu0 0
    %912 = vmatpush1.bf16.msra.mxu0 0
    %913 = vmatprep.subr.bf16.mxu0 0
    %914 = vmatpush1.bf16.msra.mxu0 0
    %915 = vmatprep.subr.bf16.mxu0 0
    %916 = vmatpush1.bf16.msra.mxu0 0
    %917 = vmatprep.subr.bf16.mxu0 0
    %918 = vmatpush1.bf16.msra.mxu0 0
    %919 = vmatprep.subr.bf16.mxu0 0
    %920 = vmatpush1.bf16.msra.mxu0 0
    %921 = vmatprep.subr.bf16.mxu0 0
    %922 = vmatpush1.bf16.msra.mxu0 %v905
    %923 = vmatprep.subr.bf16.mxu0 0
    %924 = vmatpush2.bf16.msra.mxu0 0
    %925 = vmatprep.subr.bf16.mxu0 0
    %926 = vmatpush2.bf16.msra.mxu0 0
    %927 = vmatprep.subr.bf16.mxu0 0
    %928 = vmatpush2.bf16.msra.mxu0 0
    %929 = vmatprep.subr.bf16.mxu0 0
    %930 = vmatpush2.bf16.msra.mxu0 0
    %931 = vmatprep.subr.bf16.mxu0 0
    %932 = vmatpush2.bf16.msra.mxu0 0
    %933 = vmatprep.subr.bf16.mxu0 0
    %934 = vmatpush2.bf16.msra.mxu0 0
    %935 = vmatprep.subr.bf16.mxu0 0
    %936 = vmatpush2.bf16.msra.mxu0 0
    %937 = vmatprep.subr.bf16.mxu0 0
    %938 = vmatpush2.bf16.msra.mxu0 0
    %939 = vmatprep.mubr.bf16.mxu0 0
    %940 = vmatmul.mubr.bf16.gmra.mxu0 %v902
    %v941 = vpop.f32.mrf.mxu0
    %v942 = vadd.f32 0.0, %v941
    %v943 = vpop.f32.mrf.mxu0
    %v944 = vpop.f32.mrf.mxu0
    %v945 = vadd.f32 0.0, %v944
    %v946 = vpop.f32.mrf.mxu0
    %947 = vdwg.mxu0
    %v948 = vadd.f32 %v672, %v942
    %v949 = vadd.f32 %v675, %v945
    %950 = vrot.lane.b32.xlu0 %v136, 104
    %v951 = vpop.permute.xlu0 %950
    %952 = vrot.lane.b32.xlu0 %v136, 72
    %v953 = vpop.permute.xlu0 %952
    %v955 = vsel %vm141, %v951, 0
    %v958 = vsel %vm141, %v953, 0
    %960 = vmatprep.subr.bf16.mxu0 0
    %961 = vmatpush1.bf16.xpose.msra.mxu0 0
    %962 = vmatprep.subr.bf16.mxu0 0
    %963 = vmatpush1.bf16.xpose.msra.mxu0 0
    %964 = vmatprep.subr.bf16.mxu0 0
    %965 = vmatpush1.bf16.xpose.msra.mxu0 0
    %966 = vmatprep.subr.bf16.mxu0 0
    %967 = vmatpush1.bf16.xpose.msra.mxu0 0
    %968 = vmatprep.subr.bf16.mxu0 0
    %969 = vmatpush1.bf16.xpose.msra.mxu0 0
    %970 = vmatprep.subr.bf16.mxu0 0
    %971 = vmatpush1.bf16.xpose.msra.mxu0 0
    %972 = vmatprep.subr.bf16.mxu0 0
    %973 = vmatpush1.bf16.xpose.msra.mxu0 0
    %974 = vmatprep.subr.bf16.mxu0 0
    %975 = vmatpush1.bf16.xpose.msra.mxu0 %v958
    %976 = vmatprep.subr.bf16.mxu0 0
    %977 = vmatpush2.bf16.xpose.msra.mxu0 0
    %978 = vmatprep.subr.bf16.mxu0 0
    %979 = vmatpush2.bf16.xpose.msra.mxu0 0
    %980 = vmatprep.subr.bf16.mxu0 0
    %981 = vmatpush2.bf16.xpose.msra.mxu0 0
    %982 = vmatprep.subr.bf16.mxu0 0
    %983 = vmatpush2.bf16.xpose.msra.mxu0 0
    %984 = vmatprep.subr.bf16.mxu0 0
    %985 = vmatpush2.bf16.xpose.msra.mxu0 0
    %986 = vmatprep.subr.bf16.mxu0 0
    %987 = vmatpush2.bf16.xpose.msra.mxu0 0
    %988 = vmatprep.subr.bf16.mxu0 0
    %989 = vmatpush2.bf16.xpose.msra.mxu0 0
    %990 = vmatprep.subr.bf16.mxu0 0
    %991 = vmatpush2.bf16.xpose.msra.mxu0 0
    %992 = vmatprep.mubr.bf16.mxu0 0
    %993 = vmatmul.mubr.bf16.gmra.mxu0 %v955
    %v994 = vpop.f32.mrf.mxu0
    %v995 = vadd.f32 0.0, %v994
    %v996 = vpop.f32.mrf.mxu0
    %v997 = vpop.f32.mrf.mxu0
    %v998 = vpop.f32.mrf.mxu0
    %999 = vdwg.mxu0
    %1000 = vrot.lane.b32.xlu0 %v137, 104
    %v1001 = vpop.permute.xlu0 %1000
    %1002 = vrot.lane.b32.xlu0 %v137, 72
    %v1003 = vpop.permute.xlu0 %1002
    %v1005 = vsel %vm141, %v1001, 0
    %v1008 = vsel %vm141, %v1003, 0
    %1010 = vmatprep.subr.bf16.mxu0 0
    %1011 = vmatpush1.bf16.xpose.msra.mxu0 0
    %1012 = vmatprep.subr.bf16.mxu0 0
    %1013 = vmatpush1.bf16.xpose.msra.mxu0 0
    %1014 = vmatprep.subr.bf16.mxu0 0
    %1015 = vmatpush1.bf16.xpose.msra.mxu0 0
    %1016 = vmatprep.subr.bf16.mxu0 0
    %1017 = vmatpush1.bf16.xpose.msra.mxu0 0
    %1018 = vmatprep.subr.bf16.mxu0 0
    %1019 = vmatpush1.bf16.xpose.msra.mxu0 0
    %1020 = vmatprep.subr.bf16.mxu0 0
    %1021 = vmatpush1.bf16.xpose.msra.mxu0 0
    %1022 = vmatprep.subr.bf16.mxu0 0
    %1023 = vmatpush1.bf16.xpose.msra.mxu0 0
    %1024 = vmatprep.subr.bf16.mxu0 0
    %1025 = vmatpush1.bf16.xpose.msra.mxu0 %v1008
    %1026 = vmatprep.subr.bf16.mxu0 0
    %1027 = vmatpush2.bf16.xpose.msra.mxu0 0
    %1028 = vmatprep.subr.bf16.mxu0 0
    %1029 = vmatpush2.bf16.xpose.msra.mxu0 0
    %1030 = vmatprep.subr.bf16.mxu0 0
    %1031 = vmatpush2.bf16.xpose.msra.mxu0 0
    %1032 = vmatprep.subr.bf16.mxu0 0
    %1033 = vmatpush2.bf16.xpose.msra.mxu0 0
    %1034 = vmatprep.subr.bf16.mxu0 0
    %1035 = vmatpush2.bf16.xpose.msra.mxu0 0
    %1036 = vmatprep.subr.bf16.mxu0 0
    %1037 = vmatpush2.bf16.xpose.msra.mxu0 0
    %1038 = vmatprep.subr.bf16.mxu0 0
    %1039 = vmatpush2.bf16.xpose.msra.mxu0 0
    %1040 = vmatprep.subr.bf16.mxu0 0
    %1041 = vmatpush2.bf16.xpose.msra.mxu0 0
    %1042 = vmatprep.mubr.bf16.mxu0 0
    %1043 = vmatmul.mubr.bf16.gmra.mxu0 %v1005
    %v1044 = vpop.f32.mrf.mxu0
    %v1045 = vadd.f32 0.0, %v1044
    %v1046 = vpop.f32.mrf.mxu0
    %v1047 = vpop.f32.mrf.mxu0
    %v1048 = vpop.f32.mrf.mxu0
    %1049 = vdwg.mxu0
    %v1050 = vsel %vm141, %v995, -inf
    %1051 = vmax.xlane.f32.xlu0 %v1050
    %v1052 = vpop.xlane.xlu0 %1051
    %v1053 = vsel %vm141, %v1045, -inf
    %1054 = vmax.xlane.f32.xlu0 %v1053
    %v1055 = vpop.xlane.xlu0 %1054
    %v1056 = vsub.f32 %v995, %v1052
    %v1057 = vsub.f32 %v1045, %v1055
    %v1058 = vmul.f32 %v1056, 1.442695
    %v1059 = vpow.pop %v1058
    %v1060 = vmul.f32 %v1057, 1.442695
    %v1061 = vpow.pop %v1060
    %v1062 = vsel %vm141, %v1059, 0.0
    %1063 = vadd.xlane.f32.xlu0 %v1062
    %v1064 = vpop.xlane.xlu0 %1063
    %v1065 = vsel %vm141, %v1061, 0.0
    %1066 = vadd.xlane.f32.xlu0 %v1065
    %v1067 = vpop.xlane.xlu0 %1066
    %v1068 = vrcp.pop %v1064
    %v1069 = vrcp.pop %v1067
    %v1070 = vmul.f32 %v1059, %v1068
    %v1071 = vmul.f32 %v1061, %v1069
    %v1072 = vpack.c.bf16 %v1070, %v1070
    %v1073 = vpack.c.bf16 %v1071, %v1071
    %1074 = vrot.lane.b32.xlu0 %v136, 40
    %v1075 = vpop.permute.xlu0 %1074
    %v1077 = vsel %vm141, %v1072, 0
    %v1080 = vsel %vm266, %v1075, 0
    %1082 = vmatprep.subr.bf16.mxu0 0
    %1083 = vmatpush1.bf16.msra.mxu0 0
    %1084 = vmatprep.subr.bf16.mxu0 0
    %1085 = vmatpush1.bf16.msra.mxu0 0
    %1086 = vmatprep.subr.bf16.mxu0 0
    %1087 = vmatpush1.bf16.msra.mxu0 0
    %1088 = vmatprep.subr.bf16.mxu0 0
    %1089 = vmatpush1.bf16.msra.mxu0 0
    %1090 = vmatprep.subr.bf16.mxu0 0
    %1091 = vmatpush1.bf16.msra.mxu0 0
    %1092 = vmatprep.subr.bf16.mxu0 0
    %1093 = vmatpush1.bf16.msra.mxu0 0
    %1094 = vmatprep.subr.bf16.mxu0 0
    %1095 = vmatpush1.bf16.msra.mxu0 0
    %1096 = vmatprep.subr.bf16.mxu0 0
    %1097 = vmatpush1.bf16.msra.mxu0 %v1080
    %1098 = vmatprep.subr.bf16.mxu0 0
    %1099 = vmatpush2.bf16.msra.mxu0 0
    %1100 = vmatprep.subr.bf16.mxu0 0
    %1101 = vmatpush2.bf16.msra.mxu0 0
    %1102 = vmatprep.subr.bf16.mxu0 0
    %1103 = vmatpush2.bf16.msra.mxu0 0
    %1104 = vmatprep.subr.bf16.mxu0 0
    %1105 = vmatpush2.bf16.msra.mxu0 0
    %1106 = vmatprep.subr.bf16.mxu0 0
    %1107 = vmatpush2.bf16.msra.mxu0 0
    %1108 = vmatprep.subr.bf16.mxu0 0
    %1109 = vmatpush2.bf16.msra.mxu0 0
    %1110 = vmatprep.subr.bf16.mxu0 0
    %1111 = vmatpush2.bf16.msra.mxu0 0
    %1112 = vmatprep.subr.bf16.mxu0 0
    %1113 = vmatpush2.bf16.msra.mxu0 0
    %1114 = vmatprep.mubr.bf16.mxu0 0
    %1115 = vmatmul.mubr.bf16.gmra.mxu0 %v1077
    %v1116 = vpop.f32.mrf.mxu0
    %v1117 = vadd.f32 0.0, %v1116
    %v1118 = vpop.f32.mrf.mxu0
    %v1119 = vpop.f32.mrf.mxu0
    %v1120 = vpop.f32.mrf.mxu0
    %1121 = vdwg.mxu0
    %1122 = vrot.lane.b32.xlu0 %v137, 40
    %v1123 = vpop.permute.xlu0 %1122
    %v1125 = vsel %vm141, %v1073, 0
    %v1128 = vsel %vm266, %v1123, 0
    %1130 = vmatprep.subr.bf16.mxu0 0
    %1131 = vmatpush1.bf16.msra.mxu0 0
    %1132 = vmatprep.subr.bf16.mxu0 0
    %1133 = vmatpush1.bf16.msra.mxu0 0
    %1134 = vmatprep.subr.bf16.mxu0 0
    %1135 = vmatpush1.bf16.msra.mxu0 0
    %1136 = vmatprep.subr.bf16.mxu0 0
    %1137 = vmatpush1.bf16.msra.mxu0 0
    %1138 = vmatprep.subr.bf16.mxu0 0
    %1139 = vmatpush1.bf16.msra.mxu0 0
    %1140 = vmatprep.subr.bf16.mxu0 0
    %1141 = vmatpush1.bf16.msra.mxu0 0
    %1142 = vmatprep.subr.bf16.mxu0 0
    %1143 = vmatpush1.bf16.msra.mxu0 0
    %1144 = vmatprep.subr.bf16.mxu0 0
    %1145 = vmatpush1.bf16.msra.mxu0 %v1128
    %1146 = vmatprep.subr.bf16.mxu0 0
    %1147 = vmatpush2.bf16.msra.mxu0 0
    %1148 = vmatprep.subr.bf16.mxu0 0
    %1149 = vmatpush2.bf16.msra.mxu0 0
    %1150 = vmatprep.subr.bf16.mxu0 0
    %1151 = vmatpush2.bf16.msra.mxu0 0
    %1152 = vmatprep.subr.bf16.mxu0 0
    %1153 = vmatpush2.bf16.msra.mxu0 0
    %1154 = vmatprep.subr.bf16.mxu0 0
    %1155 = vmatpush2.bf16.msra.mxu0 0
    %1156 = vmatprep.subr.bf16.mxu0 0
    %1157 = vmatpush2.bf16.msra.mxu0 0
    %1158 = vmatprep.subr.bf16.mxu0 0
    %1159 = vmatpush2.bf16.msra.mxu0 0
    %1160 = vmatprep.subr.bf16.mxu0 0
    %1161 = vmatpush2.bf16.msra.mxu0 0
    %1162 = vmatprep.mubr.bf16.mxu0 0
    %1163 = vmatmul.mubr.bf16.gmra.mxu0 %v1125
    %v1164 = vpop.f32.mrf.mxu0
    %v1165 = vadd.f32 0.0, %v1164
    %v1166 = vpop.f32.mrf.mxu0
    %v1167 = vpop.f32.mrf.mxu0
    %v1168 = vpop.f32.mrf.mxu0
    %1169 = vdwg.mxu0
    %v1170 = vld [vmem:[#allocation7 + $0x18] sm:$0xff]
    %v1171 = vpack.c.bf16 %v1170, %v1170
    %v1172 = vpack.c.bf16 %v1165, %v1117
    %v1174 = vsel %vm141, %v1172, 0
    %v1177 = vsel %vm266, %v1171, 0
    %1179 = vmatprep.subr.bf16.mxu0 0
    %1180 = vmatpush1.bf16.msra.mxu0 0
    %1181 = vmatprep.subr.bf16.mxu0 0
    %1182 = vmatpush1.bf16.msra.mxu0 0
    %1183 = vmatprep.subr.bf16.mxu0 0
    %1184 = vmatpush1.bf16.msra.mxu0 0
    %1185 = vmatprep.subr.bf16.mxu0 0
    %1186 = vmatpush1.bf16.msra.mxu0 0
    %1187 = vmatprep.subr.bf16.mxu0 0
    %1188 = vmatpush1.bf16.msra.mxu0 0
    %1189 = vmatprep.subr.bf16.mxu0 0
    %1190 = vmatpush1.bf16.msra.mxu0 0
    %1191 = vmatprep.subr.bf16.mxu0 0
    %1192 = vmatpush1.bf16.msra.mxu0 0
    %1193 = vmatprep.subr.bf16.mxu0 0
    %1194 = vmatpush1.bf16.msra.mxu0 %v1177
    %1195 = vmatprep.subr.bf16.mxu0 0
    %1196 = vmatpush2.bf16.msra.mxu0 0
    %1197 = vmatprep.subr.bf16.mxu0 0
    %1198 = vmatpush2.bf16.msra.mxu0 0
    %1199 = vmatprep.subr.bf16.mxu0 0
    %1200 = vmatpush2.bf16.msra.mxu0 0
    %1201 = vmatprep.subr.bf16.mxu0 0
    %1202 = vmatpush2.bf16.msra.mxu0 0
    %1203 = vmatprep.subr.bf16.mxu0 0
    %1204 = vmatpush2.bf16.msra.mxu0 0
    %1205 = vmatprep.subr.bf16.mxu0 0
    %1206 = vmatpush2.bf16.msra.mxu0 0
    %1207 = vmatprep.subr.bf16.mxu0 0
    %1208 = vmatpush2.bf16.msra.mxu0 0
    %1209 = vmatprep.subr.bf16.mxu0 0
    %1210 = vmatpush2.bf16.msra.mxu0 0
    %1211 = vmatprep.mubr.bf16.mxu0 0
    %1212 = vmatmul.mubr.bf16.gmra.mxu0 %v1174
    %v1213 = vpop.f32.mrf.mxu0
    %v1214 = vadd.f32 0.0, %v1213
    %v1215 = vpop.f32.mrf.mxu0
    %v1216 = vpop.f32.mrf.mxu0
    %v1217 = vadd.f32 0.0, %v1216
    %v1218 = vpop.f32.mrf.mxu0
    %1219 = vdwg.mxu0
    %v1220 = vadd.f32 %v948, %v1214
    %v1221 = vadd.f32 %v949, %v1217
    %v1222 = vld [vmem:[%s4] sm:$0x1]
    %v1224 = vlaneseq
    %v1225 = vshrl.u32 %v1224, 7
    %v1226 = vsub.s32 0, %v1225
    %v1227 = vrot.slane %v1222, %v1226
    %v1229 = vadd.f32 %v1220, %v1227
    %v1230 = vadd.f32 %v1221, %v1227
    %vm1231 = vcmask 261120
    %1232 = vst.msk [vmem:[#allocation8] sm:$0xff] %vm1231, %v1229
    %1233 = vst.msk [vmem:[#allocation8 + $0x8] sm:$0xff] %vm1231, %v1230
    // Predicated region
    $region34: #{tpu_custom_call.1} parent=1 // pred_check
      _
    $region35: #{tpu_custom_call.1} parent=1 // pred_check_branch
      %1235 = sbr.rel (0) target = $region37
    $region36: #{tpu_custom_call.1} parent=1 // pred_region
      %s1237 = ssub.s32 256, 256
      %1238 = vsyncadd [#allocation4], %s1237
      %s1239 = sshll.u32 [#allocation8], 4
      %s1240 = int_to_ptr.vmem [resolvable:$true] %s1239
      %1245 = dma.vmem_to_hbm [thread:$0]  %s1240, 256, %s5, [#allocation4], 128, 128, 8
    $region37: #{tpu_custom_call.1} parent=1 // pred_fallthru
      _
    // Predicated region
    $region38: #{tpu_custom_call.1} parent=1 // pred_check
      _
    $region39: #{tpu_custom_call.1} parent=1 // pred_check_branch
      %1247 = sbr.rel (0) target = $region41
    $region40: #{tpu_custom_call.1} parent=1 // pred_region
      %1248 = dma.done [#allocation4], 256
    $region41: #{tpu_custom_call.1} parent=1 // pred_fallthru
      _
    %1249 = vsyncpa [#allocation3], 1
    %1250 = vsyncpa [#allocation6], 1
    %1251 = vsyncpa [#allocation4], 1

</llo_original>
